<compile_context>
chip_gen: v7x
topology: tpu7x:2x2x1
jax: 0.10.0
libtpu: 0.0.40
codegen_flags: <defaults>
</compile_context>

<pallas_src>
import functools

import jax
import jax.numpy as jnp
from jax import lax
from jax.experimental import pallas as pl
from jax.experimental.pallas import tpu as pltpu

# ---------------------------------------------------------------------------
# Model dimensions / packed-parameter slab layout
# ---------------------------------------------------------------------------
IN_FEATURES = 3
IN_PAD = 8                       # input feature columns padded to one sublane tile
HIDDEN = 10
HIDDEN_PAD = 128                 # hidden width padded to one lane tile
OUT_FEATURES = 5
LANES = 128


def _round_up(a, b):
    return (a + b - 1) // b * b


W1_OFF = 0                            # rows [0, 8)    : w1 (3, 10), zero padded
W2_OFF = W1_OFF + IN_PAD              # rows [8, 136)  : w2 (10, 10), zero padded
W3_OFF = W2_OFF + HIDDEN_PAD          # rows [136, 264): w3 (10, 5), zero padded
B_OFF = W3_OFF + HIDDEN_PAD           # rows 264/265/266 : b1 / b2 / b3
PARAM_ROWS = _round_up(B_OFF + 3, 8)  # 272 rows -> ~136 KiB f32 slab


# ---------------------------------------------------------------------------
# Kernel: fused 3-layer MLP on one (tb, IN_PAD) batch tile.  MXU dots.
# ---------------------------------------------------------------------------
def _mlp_kernel(x_ref, p_ref, o_ref):
    x = x_ref[...]                                    # (tb, 8) f32, cols 3..7 zero

    w1 = p_ref[W1_OFF:W1_OFF + IN_PAD, :]             # (8, 128)
    w2 = p_ref[W2_OFF:W2_OFF + HIDDEN_PAD, :]         # (128, 128)
    w3 = p_ref[W3_OFF:W3_OFF + HIDDEN_PAD, :]         # (128, 128)
    b1 = p_ref[B_OFF + 0:B_OFF + 1, :]                # (1, 128)
    b2 = p_ref[B_OFF + 1:B_OFF + 2, :]
    b3 = p_ref[B_OFF + 2:B_OFF + 3, :]

    dot = functools.partial(jnp.dot,
                            preferred_element_type=jnp.float32,
                            precision=lax.Precision.HIGHEST)

    # Layer 1: (tb, 8) @ (8, 128) -> padded lanes stay exactly 0 after ReLU.
    h1 = jnp.maximum(dot(x, w1) + b1, 0.0)
    # Layer 2: (tb, 128) @ (128, 128); zero rows of w2 multiply zero lanes of h1.
    h2 = jnp.maximum(dot(h1, w2) + b2, 0.0)
    # Layer 3: no activation; only lanes [0, 5) are meaningful.
    out = dot(h2, w3) + b3

    # Store only the 5 real output features (masked vst, 20 B/row to HBM).
    o_ref[...] = out[:, :OUT_FEATURES].astype(o_ref.dtype)


# ---------------------------------------------------------------------------
# Parameter packing + wrapper
# ---------------------------------------------------------------------------
def pack_params(w1, b1, w2, b2, w3, b3):
    """Pack (in,out)-layout weights and biases into one (272, 128) f32 slab."""
    slab = jnp.zeros((PARAM_ROWS, LANES), jnp.float32)
    slab = slab.at[W1_OFF:W1_OFF + IN_FEATURES, :HIDDEN].set(
        w1.astype(jnp.float32))
    slab = slab.at[W2_OFF:W2_OFF + HIDDEN, :HIDDEN].set(w2.astype(jnp.float32))
    slab = slab.at[W3_OFF:W3_OFF + HIDDEN, :OUT_FEATURES].set(
        w3.astype(jnp.float32))
    slab = slab.at[B_OFF + 0, :HIDDEN].set(b1.reshape(-1).astype(jnp.float32))
    slab = slab.at[B_OFF + 1, :HIDDEN].set(b2.reshape(-1).astype(jnp.float32))
    slab = slab.at[B_OFF + 2, :OUT_FEATURES].set(
        b3.reshape(-1).astype(jnp.float32))
    return slab


@functools.partial(jax.jit, static_argnames=("block_batch",))
def mlp_forward(x, params_slab, *, block_batch=2048):
    """Forward pass of ModelV1.  x: (B, 3) f32 -> (B, 5) f32."""
    batch = x.shape[0]
    # Cap the tile at ceil(batch/2) (rounded to 8) so large batches produce a
    # grid with >= 2 steps (v7x megacore); per-tile VMEM stays well under the
    # 16 MiB v5e scoped default at block_batch=2048.
    tb = min(block_batch, max(8, _round_up(pl.cdiv(batch, 2), 8)))
    batch_pad = _round_up(batch, tb)

    # Zero-pad batch rows to a tile multiple and features to IN_PAD columns
    # (contiguous 32 B/row HBM reads, clean K=8 first matmul).
    x = jnp.pad(x.astype(jnp.float32),
                ((0, batch_pad - batch), (0, IN_PAD - IN_FEATURES)))

    out = pl.pallas_call(
        _mlp_kernel,
        out_shape=jax.ShapeDtypeStruct((batch_pad, OUT_FEATURES), jnp.float32),
        grid=(batch_pad // tb,),
        in_specs=[
            # Activations: one batch tile per grid step.
            pl.BlockSpec((tb, IN_PAD), lambda i: (i, 0)),
            # Parameter slab: constant index_map -> VMEM resident across grid.
            pl.BlockSpec((PARAM_ROWS, LANES), lambda i: (0, 0)),
        ],
        out_specs=pl.BlockSpec((tb, OUT_FEATURES), lambda i: (i, 0)),
        compiler_params=pltpu.CompilerParams(
            dimension_semantics=("parallel",)),
    )(x, params_slab)

    return out if batch_pad == batch else out[:batch]


# ---------------------------------------------------------------------------
# Init / reference / demo
# ---------------------------------------------------------------------------
def init_params(key, in_shape=IN_FEATURES, hidden_units=HIDDEN,
                out_shape=OUT_FEATURES, dtype=jnp.float32):
    """nn.Linear-style init; weights stored transposed as (in, out)."""
    keys = jax.random.split(key, 6)

    def linear(kw, kb, fan_in, fan_out):
        bound = 1.0 / jnp.sqrt(jnp.asarray(fan_in, dtype))
        w = jax.random.uniform(kw, (fan_in, fan_out), dtype, -bound, bound)
        b = jax.random.uniform(kb, (fan_out,), dtype, -bound, bound)
        return w, b

    w1, b1 = linear(keys[0], keys[1], in_shape, hidden_units)
    w2, b2 = linear(keys[2], keys[3], hidden_units, hidden_units)
    w3, b3 = linear(keys[4], keys[5], hidden_units, out_shape)
    return w1, b1, w2, b2, w3, b3


def reference_forward(x, w1, b1, w2, b2, w3, b3):
    dot = functools.partial(jnp.dot, precision=lax.Precision.HIGHEST)
    h1 = jnp.maximum(dot(x, w1) + b1[None, :], 0.0)
    h2 = jnp.maximum(dot(h1, w2) + b2[None, :], 0.0)
    return dot(h2, w3) + b3[None, :]


if __name__ == "__main__":
    key = jax.random.PRNGKey(0)
    k_x, k_p = jax.random.split(key)

    batch = 8
    x = jax.random.normal(k_x, (batch, IN_FEATURES), jnp.float32)
    params = init_params(k_p)
    slab = pack_params(*params)

    out = mlp_forward(x, slab)
    out = jax.block_until_ready(out)

    ref = reference_forward(x, *params)
    assert out.shape == (batch, OUT_FEATURES), out.shape
    assert jnp.allclose(out, ref, atol=1e-5, rtol=1e-5), "mismatch vs reference"

    print("KERNEL_OK")
</pallas_src>

<mosaic_0001>
module attributes {stable_mosaic.version = 11 : i64} {
  func.func @_mlp_kernel(%arg0: i32, %arg1: memref<8x8xf32, #tpu.memory_space<vmem>>, %arg2: memref<272x128xf32, #tpu.memory_space<vmem>>, %arg3: memref<8x5xf32, #tpu.memory_space<vmem>>) attributes {dimension_semantics = [#tpu.dimension_semantics<parallel>], iteration_bounds = array<i64: 1>, scalar_prefetch = 0 : i64, scratch_operands = 0 : i64, tpu.core_type = #tpu.core_type<tc>, window_params = [{transform_indices = @transform_0, window_bounds = array<i64: 8, 8>}, {pipeline_mode = #tpu.pipeline_mode<synchronous>, transform_indices = @transform_1, window_bounds = array<i64: 272, 128>}, {transform_indices = @transform_2, window_bounds = array<i64: 8, 5>}]} {
    %c0 = arith.constant 0 : index
    %c0_0 = arith.constant 0 : index
    %0 = vector.load %arg1[%c0, %c0_0] : memref<8x8xf32, #tpu.memory_space<vmem>>, vector<8x8xf32>
    %c0_1 = arith.constant 0 : index
    %c0_2 = arith.constant 0 : index
    %1 = vector.load %arg2[%c0_1, %c0_2] : memref<272x128xf32, #tpu.memory_space<vmem>>, vector<8x128xf32>
    %c8 = arith.constant 8 : index
    %c0_3 = arith.constant 0 : index
    %2 = vector.load %arg2[%c8, %c0_3] : memref<272x128xf32, #tpu.memory_space<vmem>>, vector<128x128xf32>
    %c136 = arith.constant 136 : index
    %c0_4 = arith.constant 0 : index
    %3 = vector.load %arg2[%c136, %c0_4] : memref<272x128xf32, #tpu.memory_space<vmem>>, vector<128x128xf32>
    %c264 = arith.constant 264 : index
    %c0_5 = arith.constant 0 : index
    %4 = vector.load %arg2[%c264, %c0_5] : memref<272x128xf32, #tpu.memory_space<vmem>>, vector<1x128xf32>
    %c265 = arith.constant 265 : index
    %c0_6 = arith.constant 0 : index
    %5 = vector.load %arg2[%c265, %c0_6] : memref<272x128xf32, #tpu.memory_space<vmem>>, vector<1x128xf32>
    %c266 = arith.constant 266 : index
    %c0_7 = arith.constant 0 : index
    %6 = vector.load %arg2[%c266, %c0_7] : memref<272x128xf32, #tpu.memory_space<vmem>>, vector<1x128xf32>
    %cst = arith.constant dense<0.000000e+00> : vector<8x128xf32>
    %7 = tpu.matmul %0, %1, %cst {dimension_numbers = #tpu.dot_dimension_numbers<[1], [0], [0], [1], [0, 0, 1, 1], [], []>, precision = #tpu.contract_precision<fp32>} : vector<8x8xf32>, vector<8x128xf32>, vector<8x128xf32> -> vector<8x128xf32>
    %8 = vector.broadcast %4 : vector<1x128xf32> to vector<8x128xf32>
    %9 = arith.addf %7, %8 : vector<8x128xf32>
    %cst_8 = arith.constant 0.000000e+00 : f32
    %10 = vector.broadcast %cst_8 : f32 to vector<8x128xf32>
    %11 = arith.maximumf %9, %10 : vector<8x128xf32>
    %cst_9 = arith.constant dense<0.000000e+00> : vector<8x128xf32>
    %12 = tpu.matmul %11, %2, %cst_9 {dimension_numbers = #tpu.dot_dimension_numbers<[1], [0], [0], [1], [0, 0, 1, 1], [], []>, precision = #tpu.contract_precision<fp32>} : vector<8x128xf32>, vector<128x128xf32>, vector<8x128xf32> -> vector<8x128xf32>
    %13 = vector.broadcast %5 : vector<1x128xf32> to vector<8x128xf32>
    %14 = arith.addf %12, %13 : vector<8x128xf32>
    %cst_10 = arith.constant 0.000000e+00 : f32
    %15 = vector.broadcast %cst_10 : f32 to vector<8x128xf32>
    %16 = arith.maximumf %14, %15 : vector<8x128xf32>
    %cst_11 = arith.constant dense<0.000000e+00> : vector<8x128xf32>
    %17 = tpu.matmul %16, %3, %cst_11 {dimension_numbers = #tpu.dot_dimension_numbers<[1], [0], [0], [1], [0, 0, 1, 1], [], []>, precision = #tpu.contract_precision<fp32>} : vector<8x128xf32>, vector<128x128xf32>, vector<8x128xf32> -> vector<8x128xf32>
    %18 = vector.broadcast %6 : vector<1x128xf32> to vector<8x128xf32>
    %19 = arith.addf %17, %18 : vector<8x128xf32>
    %20 = vector.extract_strided_slice %19 {offsets = [0, 0], sizes = [8, 5], strides = [1, 1]} : vector<8x128xf32> to vector<8x5xf32>
    %c0_12 = arith.constant 0 : index
    %c0_13 = arith.constant 0 : index
    %21 = vector.load %arg3[%c0_12, %c0_13] : memref<8x5xf32, #tpu.memory_space<vmem>>, vector<8x5xf32>
    tpu.vector_store %arg3[%c0_12, %c0_13], %20 {strides = array<i32>} : memref<8x5xf32, #tpu.memory_space<vmem>>, vector<8x5xf32>,
    return
  }
  func.func @transform_0(%arg0: i32) -> (i32, i32) {
    %c0_i32 = arith.constant 0 : i32
    %c0_i32_0 = arith.constant 0 : i32
    return %arg0, %c0_i32 : i32, i32
  }
  func.func @transform_1(%arg0: i32) -> (i32, i32) {
    %c0_i32 = arith.constant 0 : i32
    %c0_i32_0 = arith.constant 0 : i32
    %c0_i32_1 = arith.constant 0 : i32
    return %c0_i32, %c0_i32_0 : i32, i32
  }
  func.func @transform_2(%arg0: i32) -> (i32, i32) {
    %c0_i32 = arith.constant 0 : i32
    %c0_i32_0 = arith.constant 0 : i32
    return %arg0, %c0_i32 : i32, i32
  }
}

</mosaic_0001>

<llo_original>
// kernel: mlp_forward.1
$region0: #{mlp_forward.1}
  #allocation0 [shape = 'u32[]', space=smem, size = 0x4, offset = 0x4, fixed_abs, tag = 'smem constant byte address 0x4 - core index']
  #allocation1 [shape = 'u32[144,128]{1,0:T(1,128)}', space=vmem, size = 0x12000, scoped, tag = 'internal scratch']
  %s0 = inlined_call_operand.vmem [shape: f32[8,8], index: 0, kind: input, shape index: {}]
  %s1 = inlined_call_operand.hbm [shape: f32[272,128], index: 1, kind: input, shape index: {}]
  %s2 = inlined_call_operand.hbm [shape: f32[8,5], index: 2, kind: output, shape index: {}]
  %s3 = sld [smem:[#allocation0]]
  $region22: #{mlp_forward.1} parent=0
    _
  %s5 = ssub.s32 1, %s3
  %s6 = scalar_select 0, %s5, %s3
  $region1: #{mlp_forward.1} parent=0
    #allocation2 [shape = 'u8[139264]{0}', space=vmem, size = 0x22000, scoped, tag = 'input window, operand 1, single buffered']
    #allocation3 [shape = 's32[1]{0}', space=sflag, size = 0x4, scoped, tag = 'scoped memory for mlp_forward.1']
    #allocation4 [shape = 's32[1]{0}', space=sflag, size = 0x4, scoped, tag = 'scoped memory for mlp_forward.1']
    #allocation5 [shape = 'u8[4096]{0}', space=vmem, size = 0x1000, scoped, tag = 'output window, operand 0, single buffered']
    %7 = vsyncpa [#allocation3], 0
    %8 = vsyncpa [#allocation4], 0
    // Predicated region
    $region2: #{mlp_forward.1} parent=1 // pred_check
      _
    $region3: #{mlp_forward.1} parent=1 // pred_check_branch
      %10 = sbr.rel (0) target = $region5
    $region4: #{mlp_forward.1} parent=1 // pred_region
      _
    $region5: #{mlp_forward.1} parent=1 // pred_fallthru
      _
    // Predicated region
    $region6: #{mlp_forward.1} parent=1 // pred_check
      _
    $region7: #{mlp_forward.1} parent=1 // pred_check_branch
      %12 = sbr.rel (0) target = $region9
    $region8: #{mlp_forward.1} parent=1 // pred_region
      %s14 = ssub.s32 4352, 4352
      %15 = vsyncadd [#allocation3], %s14
      %s16 = sshll.u32 [#allocation2], 4
      %s17 = int_to_ptr.vmem [resolvable:$true] %s16
      %22 = dma.hbm_to_vmem [thread:$0]  %s1, 4352, %s17, [#allocation3], 128, 128, 8
    $region9: #{mlp_forward.1} parent=1 // pred_fallthru
      _
    // Predicated region
    $region10: #{mlp_forward.1} parent=1 // pred_check
      _
    $region11: #{mlp_forward.1} parent=1 // pred_check_branch
      %24 = sbr.rel (0) target = $region13
    $region12: #{mlp_forward.1} parent=1 // pred_region
      %25 = dma.done [#allocation3], 4352
    $region13: #{mlp_forward.1} parent=1 // pred_fallthru
      _
    %v26 = vld [vmem:[%s0] sm:$0xff]
    %v27 = vld [vmem:[#allocation2] sm:$0xff]
    %v28 = vld [vmem:[#allocation2 + $0x8] sm:$0xff]
    %v29 = vld [vmem:[#allocation2 + $0x10] sm:$0xff]
    %v30 = vld [vmem:[#allocation2 + $0x18] sm:$0xff]
    %v31 = vld [vmem:[#allocation2 + $0x20] sm:$0xff]
    %v32 = vld [vmem:[#allocation2 + $0x28] sm:$0xff]
    %v33 = vld [vmem:[#allocation2 + $0x30] sm:$0xff]
    %v34 = vld [vmem:[#allocation2 + $0x38] sm:$0xff]
    %v35 = vld [vmem:[#allocation2 + $0x40] sm:$0xff]
    %v36 = vld [vmem:[#allocation2 + $0x48] sm:$0xff]
    %v37 = vld [vmem:[#allocation2 + $0x50] sm:$0xff]
    %v38 = vld [vmem:[#allocation2 + $0x58] sm:$0xff]
    %v39 = vld [vmem:[#allocation2 + $0x60] sm:$0xff]
    %v40 = vld [vmem:[#allocation2 + $0x68] sm:$0xff]
    %v41 = vld [vmem:[#allocation2 + $0x70] sm:$0xff]
    %v42 = vld [vmem:[#allocation2 + $0x78] sm:$0xff]
    %v43 = vld [vmem:[#allocation2 + $0x80] sm:$0xff]
    %v44 = vld [vmem:[#allocation2 + $0x88] sm:$0xff]
    %v45 = vld [vmem:[#allocation2 + $0x90] sm:$0xff]
    %v46 = vld [vmem:[#allocation2 + $0x98] sm:$0xff]
    %v47 = vld [vmem:[#allocation2 + $0xa0] sm:$0xff]
    %v48 = vld [vmem:[#allocation2 + $0xa8] sm:$0xff]
    %v49 = vld [vmem:[#allocation2 + $0xb0] sm:$0xff]
    %v50 = vld [vmem:[#allocation2 + $0xb8] sm:$0xff]
    %v51 = vld [vmem:[#allocation2 + $0xc0] sm:$0xff]
    %v52 = vld [vmem:[#allocation2 + $0xc8] sm:$0xff]
    %v53 = vld [vmem:[#allocation2 + $0xd0] sm:$0xff]
    %v54 = vld [vmem:[#allocation2 + $0xd8] sm:$0xff]
    %v55 = vld [vmem:[#allocation2 + $0xe0] sm:$0xff]
    %v56 = vld [vmem:[#allocation2 + $0xe8] sm:$0xff]
    %v57 = vld [vmem:[#allocation2 + $0xf0] sm:$0xff]
    %v58 = vld [vmem:[#allocation2 + $0xf8] sm:$0xff]
    %v59 = vld [vmem:[#allocation2 + $0x100] sm:$0xff]
    %v60 = vld [vmem:[#allocation2 + $0x108] sm:$0x1]
    %v61 = vld [vmem:[#allocation2 + $0x109] sm:$0x1]
    %v62 = vld [vmem:[#allocation2 + $0x10a] sm:$0x1]
    %v63 = vlaneseq
    %v64 = vshrl.u32 %v63, 7
    %v65 = vsub.s32 0, %v64
    %v66 = vrot.slane %v60, %v65
    %vm67 = vcmask 64512
    %v69 = vsel %vm67, %v26, 0
    %71 = vmatprep.subr.mxu0 0.0
    %v72 = vand.u32 %v27, 4294901760
    %73 = vmatpush1.msra.mxu0 %v72
    %74 = vmatprep.subr.mxu0 0.0
    %75 = vmatpush1.msra.mxu0 0.0
    %76 = vmatprep.subr.mxu0 0.0
    %77 = vmatpush1.msra.mxu0 0.0
    %78 = vmatprep.subr.mxu0 0.0
    %79 = vmatpush1.msra.mxu0 0.0
    %80 = vmatprep.subr.mxu0 0.0
    %81 = vmatpush1.msra.mxu0 0.0
    %82 = vmatprep.subr.mxu0 0.0
    %83 = vmatpush1.msra.mxu0 0.0
    %84 = vmatprep.subr.mxu0 0.0
    %85 = vmatpush1.msra.mxu0 0.0
    %86 = vmatprep.subr.mxu0 0.0
    %87 = vmatpush1.msra.mxu0 0.0
    %88 = vmatprep.subr.mxu0 0.0
    %89 = vmatpush1.msra.mxu0 0.0
    %90 = vmatprep.subr.mxu0 0.0
    %91 = vmatpush1.msra.mxu0 0.0
    %92 = vmatprep.subr.mxu0 0.0
    %93 = vmatpush1.msra.mxu0 0.0
    %94 = vmatprep.subr.mxu0 0.0
    %95 = vmatpush1.msra.mxu0 0.0
    %96 = vmatprep.subr.mxu0 0.0
    %97 = vmatpush1.msra.mxu0 0.0
    %98 = vmatprep.subr.mxu0 0.0
    %99 = vmatpush1.msra.mxu0 0.0
    %100 = vmatprep.subr.mxu0 0.0
    %101 = vmatpush1.msra.mxu0 0.0
    %102 = vmatprep.subr.mxu0 0.0
    %103 = vmatpush1.msra.mxu0 0.0
    %104 = vmatprep.subr.mxu0 0.0
    %105 = vmatpush1.msra.mxu0 0.0
    %106 = vmatprep.subr.mxu0 0.0
    %107 = vmatpush1.msra.mxu0 0.0
    %108 = vmatprep.subr.mxu0 0.0
    %109 = vmatpush1.msra.mxu0 0.0
    %110 = vmatprep.subr.mxu0 0.0
    %111 = vmatpush1.msra.mxu0 0.0
    %112 = vmatprep.subr.mxu0 0.0
    %113 = vmatpush1.msra.mxu0 0.0
    %114 = vmatprep.subr.mxu0 0.0
    %115 = vmatpush1.msra.mxu0 0.0
    %116 = vmatprep.subr.mxu0 0.0
    %117 = vmatpush1.msra.mxu0 0.0
    %118 = vmatprep.subr.mxu0 0.0
    %119 = vmatpush1.msra.mxu0 0.0
    %120 = vmatprep.subr.mxu0 0.0
    %121 = vmatpush1.msra.mxu0 0.0
    %122 = vmatprep.subr.mxu0 0.0
    %123 = vmatpush1.msra.mxu0 0.0
    %124 = vmatprep.subr.mxu0 0.0
    %125 = vmatpush1.msra.mxu0 0.0
    %126 = vmatprep.subr.mxu0 0.0
    %127 = vmatpush1.msra.mxu0 0.0
    %128 = vmatprep.subr.mxu0 0.0
    %129 = vmatpush1.msra.mxu0 0.0
    %130 = vmatprep.subr.mxu0 0.0
    %131 = vmatpush1.msra.mxu0 0.0
    %132 = vmatprep.subr.mxu0 0.0
    %133 = vmatpush1.msra.mxu0 0.0
    %134 = vmatprep.subr.mxu0 0.0
    %135 = vmatpush1.msra.mxu0 0.0
    %136 = vmatprep.mubr.f32.mxu0 0.0
    %v137 = vand.u32 %v69, 4294901760
    %v138 = vsub.f32 %v69, %v137
    %v139 = vand.u32 %v138, 4294901760
    %v140 = vsub.f32 %v138, %v139
    %v141 = vand.u32 %v140, 4294901760
    %142 = vmatmul.mubr.f32.gmra.mrb[0].mxu0 %v141
    %v143 = vpop.f32.mrb[0].mxu0
    %v144 = vadd.f32 %v66, %v143
    %v145 = vpop.f32.mrb[0].mxu0
    %146 = vdwg.mxu0
    %147 = vmatprep.subr.mxu0 0.0
    %v148 = vand.u32 %v27, 4294901760
    %v149 = vsub.f32 %v27, %v148
    %v150 = vand.u32 %v149, 4294901760
    %v151 = vsub.f32 %v149, %v150
    %v152 = vand.u32 %v151, 4294901760
    %153 = vmatpush1.msra.mxu0 %v152
    %154 = vmatprep.subr.mxu0 0.0
    %155 = vmatpush1.msra.mxu0 0.0
    %156 = vmatprep.subr.mxu0 0.0
    %157 = vmatpush1.msra.mxu0 0.0
    %158 = vmatprep.subr.mxu0 0.0
    %159 = vmatpush1.msra.mxu0 0.0
    %160 = vmatprep.subr.mxu0 0.0
    %161 = vmatpush1.msra.mxu0 0.0
    %162 = vmatprep.subr.mxu0 0.0
    %163 = vmatpush1.msra.mxu0 0.0
    %164 = vmatprep.subr.mxu0 0.0
    %165 = vmatpush1.msra.mxu0 0.0
    %166 = vmatprep.subr.mxu0 0.0
    %167 = vmatpush1.msra.mxu0 0.0
    %168 = vmatprep.subr.mxu0 0.0
    %169 = vmatpush1.msra.mxu0 0.0
    %170 = vmatprep.subr.mxu0 0.0
    %171 = vmatpush1.msra.mxu0 0.0
    %172 = vmatprep.subr.mxu0 0.0
    %173 = vmatpush1.msra.mxu0 0.0
    %174 = vmatprep.subr.mxu0 0.0
    %175 = vmatpush1.msra.mxu0 0.0
    %176 = vmatprep.subr.mxu0 0.0
    %177 = vmatpush1.msra.mxu0 0.0
    %178 = vmatprep.subr.mxu0 0.0
    %179 = vmatpush1.msra.mxu0 0.0
    %180 = vmatprep.subr.mxu0 0.0
    %181 = vmatpush1.msra.mxu0 0.0
    %182 = vmatprep.subr.mxu0 0.0
    %183 = vmatpush1.msra.mxu0 0.0
    %184 = vmatprep.subr.mxu0 0.0
    %185 = vmatpush1.msra.mxu0 0.0
    %186 = vmatprep.subr.mxu0 0.0
    %187 = vmatpush1.msra.mxu0 0.0
    %188 = vmatprep.subr.mxu0 0.0
    %189 = vmatpush1.msra.mxu0 0.0
    %190 = vmatprep.subr.mxu0 0.0
    %191 = vmatpush1.msra.mxu0 0.0
    %192 = vmatprep.subr.mxu0 0.0
    %193 = vmatpush1.msra.mxu0 0.0
    %194 = vmatprep.subr.mxu0 0.0
    %195 = vmatpush1.msra.mxu0 0.0
    %196 = vmatprep.subr.mxu0 0.0
    %197 = vmatpush1.msra.mxu0 0.0
    %198 = vmatprep.subr.mxu0 0.0
    %199 = vmatpush1.msra.mxu0 0.0
    %200 = vmatprep.subr.mxu0 0.0
    %201 = vmatpush1.msra.mxu0 0.0
    %202 = vmatprep.subr.mxu0 0.0
    %203 = vmatpush1.msra.mxu0 0.0
    %204 = vmatprep.subr.mxu0 0.0
    %205 = vmatpush1.msra.mxu0 0.0
    %206 = vmatprep.subr.mxu0 0.0
    %207 = vmatpush1.msra.mxu0 0.0
    %208 = vmatprep.subr.mxu0 0.0
    %209 = vmatpush1.msra.mxu0 0.0
    %210 = vmatprep.subr.mxu0 0.0
    %211 = vmatpush1.msra.mxu0 0.0
    %212 = vmatprep.subr.mxu0 0.0
    %213 = vmatpush1.msra.mxu0 0.0
    %214 = vmatprep.subr.mxu0 0.0
    %215 = vmatpush1.msra.mxu0 0.0
    %216 = vmatprep.mubr.f32.mxu0 0.0
    %v217 = vand.u32 %v69, 4294901760
    %218 = vmatmul.mubr.f32.gmra.mrb[0].mxu0 %v217
    %v219 = vpop.f32.mrb[0].mxu0
    %v220 = vadd.f32 %v144, %v219
    %v221 = vpop.f32.mrb[0].mxu0
    %222 = vdwg.mxu0
    %223 = vmatprep.subr.mxu0 0.0
    %v224 = vand.u32 %v27, 4294901760
    %v225 = vsub.f32 %v27, %v224
    %226 = vmatpush1.msra.mxu0 %v225
    %227 = vmatprep.subr.mxu0 0.0
    %228 = vmatpush1.msra.mxu0 0.0
    %229 = vmatprep.subr.mxu0 0.0
    %230 = vmatpush1.msra.mxu0 0.0
    %231 = vmatprep.subr.mxu0 0.0
    %232 = vmatpush1.msra.mxu0 0.0
    %233 = vmatprep.subr.mxu0 0.0
    %234 = vmatpush1.msra.mxu0 0.0
    %235 = vmatprep.subr.mxu0 0.0
    %236 = vmatpush1.msra.mxu0 0.0
    %237 = vmatprep.subr.mxu0 0.0
    %238 = vmatpush1.msra.mxu0 0.0
    %239 = vmatprep.subr.mxu0 0.0
    %240 = vmatpush1.msra.mxu0 0.0
    %241 = vmatprep.subr.mxu0 0.0
    %242 = vmatpush1.msra.mxu0 0.0
    %243 = vmatprep.subr.mxu0 0.0
    %244 = vmatpush1.msra.mxu0 0.0
    %245 = vmatprep.subr.mxu0 0.0
    %246 = vmatpush1.msra.mxu0 0.0
    %247 = vmatprep.subr.mxu0 0.0
    %248 = vmatpush1.msra.mxu0 0.0
    %249 = vmatprep.subr.mxu0 0.0
    %250 = vmatpush1.msra.mxu0 0.0
    %251 = vmatprep.subr.mxu0 0.0
    %252 = vmatpush1.msra.mxu0 0.0
    %253 = vmatprep.subr.mxu0 0.0
    %254 = vmatpush1.msra.mxu0 0.0
    %255 = vmatprep.subr.mxu0 0.0
    %256 = vmatpush1.msra.mxu0 0.0
    %257 = vmatprep.subr.mxu0 0.0
    %258 = vmatpush1.msra.mxu0 0.0
    %259 = vmatprep.subr.mxu0 0.0
    %260 = vmatpush1.msra.mxu0 0.0
    %261 = vmatprep.subr.mxu0 0.0
    %262 = vmatpush1.msra.mxu0 0.0
    %263 = vmatprep.subr.mxu0 0.0
    %264 = vmatpush1.msra.mxu0 0.0
    %265 = vmatprep.subr.mxu0 0.0
    %266 = vmatpush1.msra.mxu0 0.0
    %267 = vmatprep.subr.mxu0 0.0
    %268 = vmatpush1.msra.mxu0 0.0
    %269 = vmatprep.subr.mxu0 0.0
    %270 = vmatpush1.msra.mxu0 0.0
    %271 = vmatprep.subr.mxu0 0.0
    %272 = vmatpush1.msra.mxu0 0.0
    %273 = vmatprep.subr.mxu0 0.0
    %274 = vmatpush1.msra.mxu0 0.0
    %275 = vmatprep.subr.mxu0 0.0
    %276 = vmatpush1.msra.mxu0 0.0
    %277 = vmatprep.subr.mxu0 0.0
    %278 = vmatpush1.msra.mxu0 0.0
    %279 = vmatprep.subr.mxu0 0.0
    %280 = vmatpush1.msra.mxu0 0.0
    %281 = vmatprep.subr.mxu0 0.0
    %282 = vmatpush1.msra.mxu0 0.0
    %283 = vmatprep.subr.mxu0 0.0
    %284 = vmatpush1.msra.mxu0 0.0
    %285 = vmatprep.subr.mxu0 0.0
    %286 = vmatpush1.msra.mxu0 0.0
    %287 = vmatprep.subr.mxu0 0.0
    %288 = vmatpush1.msra.mxu0 0.0
    %289 = vmatprep.mubr.f32.mxu0 0.0
    %v290 = vand.u32 %v69, 4294901760
    %v291 = vsub.f32 %v69, %v290
    %292 = vmatmul.mubr.f32.gmra.mrb[0].mxu0 %v291
    %v293 = vpop.f32.mrb[0].mxu0
    %v294 = vadd.f32 %v220, %v293
    %v295 = vpop.f32.mrb[0].mxu0
    %296 = vdwg.mxu0
    %297 = vmatprep.subr.mxu0 0.0
    %v298 = vand.u32 %v27, 4294901760
    %299 = vmatpush1.msra.mxu0 %v298
    %300 = vmatprep.subr.mxu0 0.0
    %301 = vmatpush1.msra.mxu0 0.0
    %302 = vmatprep.subr.mxu0 0.0
    %303 = vmatpush1.msra.mxu0 0.0
    %304 = vmatprep.subr.mxu0 0.0
    %305 = vmatpush1.msra.mxu0 0.0
    %306 = vmatprep.subr.mxu0 0.0
    %307 = vmatpush1.msra.mxu0 0.0
    %308 = vmatprep.subr.mxu0 0.0
    %309 = vmatpush1.msra.mxu0 0.0
    %310 = vmatprep.subr.mxu0 0.0
    %311 = vmatpush1.msra.mxu0 0.0
    %312 = vmatprep.subr.mxu0 0.0
    %313 = vmatpush1.msra.mxu0 0.0
    %314 = vmatprep.subr.mxu0 0.0
    %315 = vmatpush1.msra.mxu0 0.0
    %316 = vmatprep.subr.mxu0 0.0
    %317 = vmatpush1.msra.mxu0 0.0
    %318 = vmatprep.subr.mxu0 0.0
    %319 = vmatpush1.msra.mxu0 0.0
    %320 = vmatprep.subr.mxu0 0.0
    %321 = vmatpush1.msra.mxu0 0.0
    %322 = vmatprep.subr.mxu0 0.0
    %323 = vmatpush1.msra.mxu0 0.0
    %324 = vmatprep.subr.mxu0 0.0
    %325 = vmatpush1.msra.mxu0 0.0
    %326 = vmatprep.subr.mxu0 0.0
    %327 = vmatpush1.msra.mxu0 0.0
    %328 = vmatprep.subr.mxu0 0.0
    %329 = vmatpush1.msra.mxu0 0.0
    %330 = vmatprep.subr.mxu0 0.0
    %331 = vmatpush1.msra.mxu0 0.0
    %332 = vmatprep.subr.mxu0 0.0
    %333 = vmatpush1.msra.mxu0 0.0
    %334 = vmatprep.subr.mxu0 0.0
    %335 = vmatpush1.msra.mxu0 0.0
    %336 = vmatprep.subr.mxu0 0.0
    %337 = vmatpush1.msra.mxu0 0.0
    %338 = vmatprep.subr.mxu0 0.0
    %339 = vmatpush1.msra.mxu0 0.0
    %340 = vmatprep.subr.mxu0 0.0
    %341 = vmatpush1.msra.mxu0 0.0
    %342 = vmatprep.subr.mxu0 0.0
    %343 = vmatpush1.msra.mxu0 0.0
    %344 = vmatprep.subr.mxu0 0.0
    %345 = vmatpush1.msra.mxu0 0.0
    %346 = vmatprep.subr.mxu0 0.0
    %347 = vmatpush1.msra.mxu0 0.0
    %348 = vmatprep.subr.mxu0 0.0
    %349 = vmatpush1.msra.mxu0 0.0
    %350 = vmatprep.subr.mxu0 0.0
    %351 = vmatpush1.msra.mxu0 0.0
    %352 = vmatprep.subr.mxu0 0.0
    %353 = vmatpush1.msra.mxu0 0.0
    %354 = vmatprep.subr.mxu0 0.0
    %355 = vmatpush1.msra.mxu0 0.0
    %356 = vmatprep.subr.mxu0 0.0
    %357 = vmatpush1.msra.mxu0 0.0
    %358 = vmatprep.subr.mxu0 0.0
    %359 = vmatpush1.msra.mxu0 0.0
    %360 = vmatprep.subr.mxu0 0.0
    %361 = vmatpush1.msra.mxu0 0.0
    %362 = vmatprep.mubr.f32.mxu0 0.0
    %v363 = vand.u32 %v69, 4294901760
    %v364 = vsub.f32 %v69, %v363
    %v365 = vand.u32 %v364, 4294901760
    %366 = vmatmul.mubr.f32.gmra.mrb[0].mxu0 %v365
    %v367 = vpop.f32.mrb[0].mxu0
    %v368 = vadd.f32 %v294, %v367
    %v369 = vpop.f32.mrb[0].mxu0
    %370 = vdwg.mxu0
    %371 = vmatprep.subr.mxu0 0.0
    %v372 = vand.u32 %v27, 4294901760
    %v373 = vsub.f32 %v27, %v372
    %v374 = vand.u32 %v373, 4294901760
    %375 = vmatpush1.msra.mxu0 %v374
    %376 = vmatprep.subr.mxu0 0.0
    %377 = vmatpush1.msra.mxu0 0.0
    %378 = vmatprep.subr.mxu0 0.0
    %379 = vmatpush1.msra.mxu0 0.0
    %380 = vmatprep.subr.mxu0 0.0
    %381 = vmatpush1.msra.mxu0 0.0
    %382 = vmatprep.subr.mxu0 0.0
    %383 = vmatpush1.msra.mxu0 0.0
    %384 = vmatprep.subr.mxu0 0.0
    %385 = vmatpush1.msra.mxu0 0.0
    %386 = vmatprep.subr.mxu0 0.0
    %387 = vmatpush1.msra.mxu0 0.0
    %388 = vmatprep.subr.mxu0 0.0
    %389 = vmatpush1.msra.mxu0 0.0
    %390 = vmatprep.subr.mxu0 0.0
    %391 = vmatpush1.msra.mxu0 0.0
    %392 = vmatprep.subr.mxu0 0.0
    %393 = vmatpush1.msra.mxu0 0.0
    %394 = vmatprep.subr.mxu0 0.0
    %395 = vmatpush1.msra.mxu0 0.0
    %396 = vmatprep.subr.mxu0 0.0
    %397 = vmatpush1.msra.mxu0 0.0
    %398 = vmatprep.subr.mxu0 0.0
    %399 = vmatpush1.msra.mxu0 0.0
    %400 = vmatprep.subr.mxu0 0.0
    %401 = vmatpush1.msra.mxu0 0.0
    %402 = vmatprep.subr.mxu0 0.0
    %403 = vmatpush1.msra.mxu0 0.0
    %404 = vmatprep.subr.mxu0 0.0
    %405 = vmatpush1.msra.mxu0 0.0
    %406 = vmatprep.subr.mxu0 0.0
    %407 = vmatpush1.msra.mxu0 0.0
    %408 = vmatprep.subr.mxu0 0.0
    %409 = vmatpush1.msra.mxu0 0.0
    %410 = vmatprep.subr.mxu0 0.0
    %411 = vmatpush1.msra.mxu0 0.0
    %412 = vmatprep.subr.mxu0 0.0
    %413 = vmatpush1.msra.mxu0 0.0
    %414 = vmatprep.subr.mxu0 0.0
    %415 = vmatpush1.msra.mxu0 0.0
    %416 = vmatprep.subr.mxu0 0.0
    %417 = vmatpush1.msra.mxu0 0.0
    %418 = vmatprep.subr.mxu0 0.0
    %419 = vmatpush1.msra.mxu0 0.0
    %420 = vmatprep.subr.mxu0 0.0
    %421 = vmatpush1.msra.mxu0 0.0
    %422 = vmatprep.subr.mxu0 0.0
    %423 = vmatpush1.msra.mxu0 0.0
    %424 = vmatprep.subr.mxu0 0.0
    %425 = vmatpush1.msra.mxu0 0.0
    %426 = vmatprep.subr.mxu0 0.0
    %427 = vmatpush1.msra.mxu0 0.0
    %428 = vmatprep.subr.mxu0 0.0
    %429 = vmatpush1.msra.mxu0 0.0
    %430 = vmatprep.subr.mxu0 0.0
    %431 = vmatpush1.msra.mxu0 0.0
    %432 = vmatprep.subr.mxu0 0.0
    %433 = vmatpush1.msra.mxu0 0.0
    %434 = vmatprep.subr.mxu0 0.0
    %435 = vmatpush1.msra.mxu0 0.0
    %436 = vmatprep.subr.mxu0 0.0
    %437 = vmatpush1.msra.mxu0 0.0
    %438 = vmatprep.mubr.f32.mxu0 0.0
    %v439 = vand.u32 %v69, 4294901760
    %440 = vmatmul.mubr.f32.gmra.mrb[0].mxu0 %v439
    %v441 = vpop.f32.mrb[0].mxu0
    %v442 = vadd.f32 %v368, %v441
    %v443 = vpop.f32.mrb[0].mxu0
    %444 = vdwg.mxu0
    %445 = vmatprep.subr.mxu0 0.0
    %v446 = vand.u32 %v27, 4294901760
    %447 = vmatpush1.msra.mxu0 %v446
    %448 = vmatprep.subr.mxu0 0.0
    %449 = vmatpush1.msra.mxu0 0.0
    %450 = vmatprep.subr.mxu0 0.0
    %451 = vmatpush1.msra.mxu0 0.0
    %452 = vmatprep.subr.mxu0 0.0
    %453 = vmatpush1.msra.mxu0 0.0
    %454 = vmatprep.subr.mxu0 0.0
    %455 = vmatpush1.msra.mxu0 0.0
    %456 = vmatprep.subr.mxu0 0.0
    %457 = vmatpush1.msra.mxu0 0.0
    %458 = vmatprep.subr.mxu0 0.0
    %459 = vmatpush1.msra.mxu0 0.0
    %460 = vmatprep.subr.mxu0 0.0
    %461 = vmatpush1.msra.mxu0 0.0
    %462 = vmatprep.subr.mxu0 0.0
    %463 = vmatpush1.msra.mxu0 0.0
    %464 = vmatprep.subr.mxu0 0.0
    %465 = vmatpush1.msra.mxu0 0.0
    %466 = vmatprep.subr.mxu0 0.0
    %467 = vmatpush1.msra.mxu0 0.0
    %468 = vmatprep.subr.mxu0 0.0
    %469 = vmatpush1.msra.mxu0 0.0
    %470 = vmatprep.subr.mxu0 0.0
    %471 = vmatpush1.msra.mxu0 0.0
    %472 = vmatprep.subr.mxu0 0.0
    %473 = vmatpush1.msra.mxu0 0.0
    %474 = vmatprep.subr.mxu0 0.0
    %475 = vmatpush1.msra.mxu0 0.0
    %476 = vmatprep.subr.mxu0 0.0
    %477 = vmatpush1.msra.mxu0 0.0
    %478 = vmatprep.subr.mxu0 0.0
    %479 = vmatpush1.msra.mxu0 0.0
    %480 = vmatprep.subr.mxu0 0.0
    %481 = vmatpush1.msra.mxu0 0.0
    %482 = vmatprep.subr.mxu0 0.0
    %483 = vmatpush1.msra.mxu0 0.0
    %484 = vmatprep.subr.mxu0 0.0
    %485 = vmatpush1.msra.mxu0 0.0
    %486 = vmatprep.subr.mxu0 0.0
    %487 = vmatpush1.msra.mxu0 0.0
    %488 = vmatprep.subr.mxu0 0.0
    %489 = vmatpush1.msra.mxu0 0.0
    %490 = vmatprep.subr.mxu0 0.0
    %491 = vmatpush1.msra.mxu0 0.0
    %492 = vmatprep.subr.mxu0 0.0
    %493 = vmatpush1.msra.mxu0 0.0
    %494 = vmatprep.subr.mxu0 0.0
    %495 = vmatpush1.msra.mxu0 0.0
    %496 = vmatprep.subr.mxu0 0.0
    %497 = vmatpush1.msra.mxu0 0.0
    %498 = vmatprep.subr.mxu0 0.0
    %499 = vmatpush1.msra.mxu0 0.0
    %500 = vmatprep.subr.mxu0 0.0
    %501 = vmatpush1.msra.mxu0 0.0
    %502 = vmatprep.subr.mxu0 0.0
    %503 = vmatpush1.msra.mxu0 0.0
    %504 = vmatprep.subr.mxu0 0.0
    %505 = vmatpush1.msra.mxu0 0.0
    %506 = vmatprep.subr.mxu0 0.0
    %507 = vmatpush1.msra.mxu0 0.0
    %508 = vmatprep.subr.mxu0 0.0
    %509 = vmatpush1.msra.mxu0 0.0
    %510 = vmatprep.mubr.f32.mxu0 0.0
    %v511 = vand.u32 %v69, 4294901760
    %512 = vmatmul.mubr.f32.gmra.mrb[0].mxu0 %v511
    %v513 = vpop.f32.mrb[0].mxu0
    %v514 = vadd.f32 %v442, %v513
    %v515 = vpop.f32.mrb[0].mxu0
    %516 = vdwg.mxu0
    %v517 = vmax.f32 %v514, 0.0
    %v518 = vlaneseq
    %v519 = vshrl.u32 %v518, 7
    %v520 = vsub.s32 0, %v519
    %v521 = vrot.slane %v61, %v520
    %522 = vmatprep.subr.mxu0 0.0
    %v523 = vand.u32 %v28, 4294901760
    %524 = vmatpush1.msra.mxu0 %v523
    %525 = vmatprep.subr.mxu0 0.0
    %v526 = vand.u32 %v29, 4294901760
    %527 = vmatpush1.msra.mxu0 %v526
    %528 = vmatprep.subr.mxu0 0.0
    %v529 = vand.u32 %v30, 4294901760
    %530 = vmatpush1.msra.mxu0 %v529
    %531 = vmatprep.subr.mxu0 0.0
    %v532 = vand.u32 %v31, 4294901760
    %533 = vmatpush1.msra.mxu0 %v532
    %534 = vmatprep.subr.mxu0 0.0
    %v535 = vand.u32 %v32, 4294901760
    %536 = vmatpush1.msra.mxu0 %v535
    %537 = vmatprep.subr.mxu0 0.0
    %v538 = vand.u32 %v33, 4294901760
    %539 = vmatpush1.msra.mxu0 %v538
    %540 = vmatprep.subr.mxu0 0.0
    %v541 = vand.u32 %v34, 4294901760
    %542 = vmatpush1.msra.mxu0 %v541
    %543 = vmatprep.subr.mxu0 0.0
    %v544 = vand.u32 %v35, 4294901760
    %545 = vmatpush1.msra.mxu0 %v544
    %546 = vmatprep.subr.mxu0 0.0
    %v547 = vand.u32 %v36, 4294901760
    %548 = vmatpush1.msra.mxu0 %v547
    %549 = vmatprep.subr.mxu0 0.0
    %v550 = vand.u32 %v37, 4294901760
    %551 = vmatpush1.msra.mxu0 %v550
    %552 = vmatprep.subr.mxu0 0.0
    %v553 = vand.u32 %v38, 4294901760
    %554 = vmatpush1.msra.mxu0 %v553
    %555 = vmatprep.subr.mxu0 0.0
    %v556 = vand.u32 %v39, 4294901760
    %557 = vmatpush1.msra.mxu0 %v556
    %558 = vmatprep.subr.mxu0 0.0
    %v559 = vand.u32 %v40, 4294901760
    %560 = vmatpush1.msra.mxu0 %v559
    %561 = vmatprep.subr.mxu0 0.0
    %v562 = vand.u32 %v41, 4294901760
    %563 = vmatpush1.msra.mxu0 %v562
    %564 = vmatprep.subr.mxu0 0.0
    %v565 = vand.u32 %v42, 4294901760
    %566 = vmatpush1.msra.mxu0 %v565
    %567 = vmatprep.subr.mxu0 0.0
    %v568 = vand.u32 %v43, 4294901760
    %569 = vmatpush1.msra.mxu0 %v568
    %570 = vmatprep.subr.mxu0 0.0
    %571 = vmatpush1.msra.mxu0 0.0
    %572 = vmatprep.subr.mxu0 0.0
    %573 = vmatpush1.msra.mxu0 0.0
    %574 = vmatprep.subr.mxu0 0.0
    %575 = vmatpush1.msra.mxu0 0.0
    %576 = vmatprep.subr.mxu0 0.0
    %577 = vmatpush1.msra.mxu0 0.0
    %578 = vmatprep.subr.mxu0 0.0
    %579 = vmatpush1.msra.mxu0 0.0
    %580 = vmatprep.subr.mxu0 0.0
    %581 = vmatpush1.msra.mxu0 0.0
    %582 = vmatprep.subr.mxu0 0.0
    %583 = vmatpush1.msra.mxu0 0.0
    %584 = vmatprep.subr.mxu0 0.0
    %585 = vmatpush1.msra.mxu0 0.0
    %586 = vmatprep.subr.mxu0 0.0
    %587 = vmatpush1.msra.mxu0 0.0
    %588 = vmatprep.subr.mxu0 0.0
    %589 = vmatpush1.msra.mxu0 0.0
    %590 = vmatprep.subr.mxu0 0.0
    %591 = vmatpush1.msra.mxu0 0.0
    %592 = vmatprep.subr.mxu0 0.0
    %593 = vmatpush1.msra.mxu0 0.0
    %594 = vmatprep.subr.mxu0 0.0
    %595 = vmatpush1.msra.mxu0 0.0
    %596 = vmatprep.subr.mxu0 0.0
    %597 = vmatpush1.msra.mxu0 0.0
    %598 = vmatprep.subr.mxu0 0.0
    %599 = vmatpush1.msra.mxu0 0.0
    %600 = vmatprep.subr.mxu0 0.0
    %601 = vmatpush1.msra.mxu0 0.0
    %602 = vmatprep.mubr.f32.mxu0 0.0
    %v603 = vand.u32 %v517, 4294901760
    %v604 = vsub.f32 %v517, %v603
    %v605 = vand.u32 %v604, 4294901760
    %v606 = vsub.f32 %v604, %v605
    %v607 = vand.u32 %v606, 4294901760
    %608 = vmatmul.mubr.f32.gmra.mrb[0].mxu0 %v607
    %v609 = vpop.f32.mrb[0].mxu0
    %v610 = vadd.f32 %v521, %v609
    %v611 = vpop.f32.mrb[0].mxu0
    %612 = vdwg.mxu0
    %613 = vmatprep.subr.mxu0 0.0
    %v614 = vand.u32 %v28, 4294901760
    %v615 = vsub.f32 %v28, %v614
    %v616 = vand.u32 %v615, 4294901760
    %v617 = vsub.f32 %v615, %v616
    %v618 = vand.u32 %v617, 4294901760
    %619 = vmatpush1.msra.mxu0 %v618
    %620 = vmatprep.subr.mxu0 0.0
    %v621 = vand.u32 %v29, 4294901760
    %v622 = vsub.f32 %v29, %v621
    %v623 = vand.u32 %v622, 4294901760
    %v624 = vsub.f32 %v622, %v623
    %v625 = vand.u32 %v624, 4294901760
    %626 = vmatpush1.msra.mxu0 %v625
    %627 = vmatprep.subr.mxu0 0.0
    %v628 = vand.u32 %v30, 4294901760
    %v629 = vsub.f32 %v30, %v628
    %v630 = vand.u32 %v629, 4294901760
    %v631 = vsub.f32 %v629, %v630
    %v632 = vand.u32 %v631, 4294901760
    %633 = vmatpush1.msra.mxu0 %v632
    %634 = vmatprep.subr.mxu0 0.0
    %v635 = vand.u32 %v31, 4294901760
    %v636 = vsub.f32 %v31, %v635
    %v637 = vand.u32 %v636, 4294901760
    %v638 = vsub.f32 %v636, %v637
    %v639 = vand.u32 %v638, 4294901760
    %640 = vmatpush1.msra.mxu0 %v639
    %641 = vmatprep.subr.mxu0 0.0
    %v642 = vand.u32 %v32, 4294901760
    %v643 = vsub.f32 %v32, %v642
    %v644 = vand.u32 %v643, 4294901760
    %v645 = vsub.f32 %v643, %v644
    %v646 = vand.u32 %v645, 4294901760
    %647 = vmatpush1.msra.mxu0 %v646
    %648 = vmatprep.subr.mxu0 0.0
    %v649 = vand.u32 %v33, 4294901760
    %v650 = vsub.f32 %v33, %v649
    %v651 = vand.u32 %v650, 4294901760
    %v652 = vsub.f32 %v650, %v651
    %v653 = vand.u32 %v652, 4294901760
    %654 = vmatpush1.msra.mxu0 %v653
    %655 = vmatprep.subr.mxu0 0.0
    %v656 = vand.u32 %v34, 4294901760
    %v657 = vsub.f32 %v34, %v656
    %v658 = vand.u32 %v657, 4294901760
    %v659 = vsub.f32 %v657, %v658
    %v660 = vand.u32 %v659, 4294901760
    %661 = vmatpush1.msra.mxu0 %v660
    %662 = vmatprep.subr.mxu0 0.0
    %v663 = vand.u32 %v35, 4294901760
    %v664 = vsub.f32 %v35, %v663
    %v665 = vand.u32 %v664, 4294901760
    %v666 = vsub.f32 %v664, %v665
    %v667 = vand.u32 %v666, 4294901760
    %668 = vmatpush1.msra.mxu0 %v667
    %669 = vmatprep.subr.mxu0 0.0
    %v670 = vand.u32 %v36, 4294901760
    %v671 = vsub.f32 %v36, %v670
    %v672 = vand.u32 %v671, 4294901760
    %v673 = vsub.f32 %v671, %v672
    %v674 = vand.u32 %v673, 4294901760
    %675 = vmatpush1.msra.mxu0 %v674
    %676 = vmatprep.subr.mxu0 0.0
    %v677 = vand.u32 %v37, 4294901760
    %v678 = vsub.f32 %v37, %v677
    %v679 = vand.u32 %v678, 4294901760
    %v680 = vsub.f32 %v678, %v679
    %v681 = vand.u32 %v680, 4294901760
    %682 = vmatpush1.msra.mxu0 %v681
    %683 = vmatprep.subr.mxu0 0.0
    %v684 = vand.u32 %v38, 4294901760
    %v685 = vsub.f32 %v38, %v684
    %v686 = vand.u32 %v685, 4294901760
    %v687 = vsub.f32 %v685, %v686
    %v688 = vand.u32 %v687, 4294901760
    %689 = vmatpush1.msra.mxu0 %v688
    %690 = vmatprep.subr.mxu0 0.0
    %v691 = vand.u32 %v39, 4294901760
    %v692 = vsub.f32 %v39, %v691
    %v693 = vand.u32 %v692, 4294901760
    %v694 = vsub.f32 %v692, %v693
    %v695 = vand.u32 %v694, 4294901760
    %696 = vmatpush1.msra.mxu0 %v695
    %697 = vmatprep.subr.mxu0 0.0
    %v698 = vand.u32 %v40, 4294901760
    %v699 = vsub.f32 %v40, %v698
    %v700 = vand.u32 %v699, 4294901760
    %v701 = vsub.f32 %v699, %v700
    %v702 = vand.u32 %v701, 4294901760
    %703 = vmatpush1.msra.mxu0 %v702
    %704 = vmatprep.subr.mxu0 0.0
    %v705 = vand.u32 %v41, 4294901760
    %v706 = vsub.f32 %v41, %v705
    %v707 = vand.u32 %v706, 4294901760
    %v708 = vsub.f32 %v706, %v707
    %v709 = vand.u32 %v708, 4294901760
    %710 = vmatpush1.msra.mxu0 %v709
    %711 = vmatprep.subr.mxu0 0.0
    %v712 = vand.u32 %v42, 4294901760
    %v713 = vsub.f32 %v42, %v712
    %v714 = vand.u32 %v713, 4294901760
    %v715 = vsub.f32 %v713, %v714
    %v716 = vand.u32 %v715, 4294901760
    %717 = vmatpush1.msra.mxu0 %v716
    %718 = vmatprep.subr.mxu0 0.0
    %v719 = vand.u32 %v43, 4294901760
    %v720 = vsub.f32 %v43, %v719
    %v721 = vand.u32 %v720, 4294901760
    %v722 = vsub.f32 %v720, %v721
    %v723 = vand.u32 %v722, 4294901760
    %724 = vmatpush1.msra.mxu0 %v723
    %725 = vmatprep.subr.mxu0 0.0
    %726 = vmatpush1.msra.mxu0 0.0
    %727 = vmatprep.subr.mxu0 0.0
    %728 = vmatpush1.msra.mxu0 0.0
    %729 = vmatprep.subr.mxu0 0.0
    %730 = vmatpush1.msra.mxu0 0.0
    %731 = vmatprep.subr.mxu0 0.0
    %732 = vmatpush1.msra.mxu0 0.0
    %733 = vmatprep.subr.mxu0 0.0
    %734 = vmatpush1.msra.mxu0 0.0
    %735 = vmatprep.subr.mxu0 0.0
    %736 = vmatpush1.msra.mxu0 0.0
    %737 = vmatprep.subr.mxu0 0.0
    %738 = vmatpush1.msra.mxu0 0.0
    %739 = vmatprep.subr.mxu0 0.0
    %740 = vmatpush1.msra.mxu0 0.0
    %741 = vmatprep.subr.mxu0 0.0
    %742 = vmatpush1.msra.mxu0 0.0
    %743 = vmatprep.subr.mxu0 0.0
    %744 = vmatpush1.msra.mxu0 0.0
    %745 = vmatprep.subr.mxu0 0.0
    %746 = vmatpush1.msra.mxu0 0.0
    %747 = vmatprep.subr.mxu0 0.0
    %748 = vmatpush1.msra.mxu0 0.0
    %749 = vmatprep.subr.mxu0 0.0
    %750 = vmatpush1.msra.mxu0 0.0
    %751 = vmatprep.subr.mxu0 0.0
    %752 = vmatpush1.msra.mxu0 0.0
    %753 = vmatprep.subr.mxu0 0.0
    %754 = vmatpush1.msra.mxu0 0.0
    %755 = vmatprep.subr.mxu0 0.0
    %756 = vmatpush1.msra.mxu0 0.0
    %757 = vmatprep.mubr.f32.mxu0 0.0
    %v758 = vand.u32 %v517, 4294901760
    %759 = vmatmul.mubr.f32.gmra.mrb[0].mxu0 %v758
    %v760 = vpop.f32.mrb[0].mxu0
    %v761 = vadd.f32 %v610, %v760
    %v762 = vpop.f32.mrb[0].mxu0
    %763 = vdwg.mxu0
    %764 = vmatprep.subr.mxu0 0.0
    %v765 = vand.u32 %v28, 4294901760
    %v766 = vsub.f32 %v28, %v765
    %767 = vmatpush1.msra.mxu0 %v766
    %768 = vmatprep.subr.mxu0 0.0
    %v769 = vand.u32 %v29, 4294901760
    %v770 = vsub.f32 %v29, %v769
    %771 = vmatpush1.msra.mxu0 %v770
    %772 = vmatprep.subr.mxu0 0.0
    %v773 = vand.u32 %v30, 4294901760
    %v774 = vsub.f32 %v30, %v773
    %775 = vmatpush1.msra.mxu0 %v774
    %776 = vmatprep.subr.mxu0 0.0
    %v777 = vand.u32 %v31, 4294901760
    %v778 = vsub.f32 %v31, %v777
    %779 = vmatpush1.msra.mxu0 %v778
    %780 = vmatprep.subr.mxu0 0.0
    %v781 = vand.u32 %v32, 4294901760
    %v782 = vsub.f32 %v32, %v781
    %783 = vmatpush1.msra.mxu0 %v782
    %784 = vmatprep.subr.mxu0 0.0
    %v785 = vand.u32 %v33, 4294901760
    %v786 = vsub.f32 %v33, %v785
    %787 = vmatpush1.msra.mxu0 %v786
    %788 = vmatprep.subr.mxu0 0.0
    %v789 = vand.u32 %v34, 4294901760
    %v790 = vsub.f32 %v34, %v789
    %791 = vmatpush1.msra.mxu0 %v790
    %792 = vmatprep.subr.mxu0 0.0
    %v793 = vand.u32 %v35, 4294901760
    %v794 = vsub.f32 %v35, %v793
    %795 = vmatpush1.msra.mxu0 %v794
    %796 = vmatprep.subr.mxu0 0.0
    %v797 = vand.u32 %v36, 4294901760
    %v798 = vsub.f32 %v36, %v797
    %799 = vmatpush1.msra.mxu0 %v798
    %800 = vmatprep.subr.mxu0 0.0
    %v801 = vand.u32 %v37, 4294901760
    %v802 = vsub.f32 %v37, %v801
    %803 = vmatpush1.msra.mxu0 %v802
    %804 = vmatprep.subr.mxu0 0.0
    %v805 = vand.u32 %v38, 4294901760
    %v806 = vsub.f32 %v38, %v805
    %807 = vmatpush1.msra.mxu0 %v806
    %808 = vmatprep.subr.mxu0 0.0
    %v809 = vand.u32 %v39, 4294901760
    %v810 = vsub.f32 %v39, %v809
    %811 = vmatpush1.msra.mxu0 %v810
    %812 = vmatprep.subr.mxu0 0.0
    %v813 = vand.u32 %v40, 4294901760
    %v814 = vsub.f32 %v40, %v813
    %815 = vmatpush1.msra.mxu0 %v814
    %816 = vmatprep.subr.mxu0 0.0
    %v817 = vand.u32 %v41, 4294901760
    %v818 = vsub.f32 %v41, %v817
    %819 = vmatpush1.msra.mxu0 %v818
    %820 = vmatprep.subr.mxu0 0.0
    %v821 = vand.u32 %v42, 4294901760
    %v822 = vsub.f32 %v42, %v821
    %823 = vmatpush1.msra.mxu0 %v822
    %824 = vmatprep.subr.mxu0 0.0
    %v825 = vand.u32 %v43, 4294901760
    %v826 = vsub.f32 %v43, %v825
    %827 = vmatpush1.msra.mxu0 %v826
    %828 = vmatprep.subr.mxu0 0.0
    %829 = vmatpush1.msra.mxu0 0.0
    %830 = vmatprep.subr.mxu0 0.0
    %831 = vmatpush1.msra.mxu0 0.0
    %832 = vmatprep.subr.mxu0 0.0
    %833 = vmatpush1.msra.mxu0 0.0
    %834 = vmatprep.subr.mxu0 0.0
    %835 = vmatpush1.msra.mxu0 0.0
    %836 = vmatprep.subr.mxu0 0.0
    %837 = vmatpush1.msra.mxu0 0.0
    %838 = vmatprep.subr.mxu0 0.0
    %839 = vmatpush1.msra.mxu0 0.0
    %840 = vmatprep.subr.mxu0 0.0
    %841 = vmatpush1.msra.mxu0 0.0
    %842 = vmatprep.subr.mxu0 0.0
    %843 = vmatpush1.msra.mxu0 0.0
    %844 = vmatprep.subr.mxu0 0.0
    %845 = vmatpush1.msra.mxu0 0.0
    %846 = vmatprep.subr.mxu0 0.0
    %847 = vmatpush1.msra.mxu0 0.0
    %848 = vmatprep.subr.mxu0 0.0
    %849 = vmatpush1.msra.mxu0 0.0
    %850 = vmatprep.subr.mxu0 0.0
    %851 = vmatpush1.msra.mxu0 0.0
    %852 = vmatprep.subr.mxu0 0.0
    %853 = vmatpush1.msra.mxu0 0.0
    %854 = vmatprep.subr.mxu0 0.0
    %855 = vmatpush1.msra.mxu0 0.0
    %856 = vmatprep.subr.mxu0 0.0
    %857 = vmatpush1.msra.mxu0 0.0
    %858 = vmatprep.subr.mxu0 0.0
    %859 = vmatpush1.msra.mxu0 0.0
    %860 = vmatprep.mubr.f32.mxu0 0.0
    %v861 = vand.u32 %v517, 4294901760
    %v862 = vsub.f32 %v517, %v861
    %863 = vmatmul.mubr.f32.gmra.mrb[0].mxu0 %v862
    %v864 = vpop.f32.mrb[0].mxu0
    %v865 = vadd.f32 %v761, %v864
    %v866 = vpop.f32.mrb[0].mxu0
    %867 = vdwg.mxu0
    %868 = vmatprep.subr.mxu0 0.0
    %v869 = vand.u32 %v28, 4294901760
    %870 = vmatpush1.msra.mxu0 %v869
    %871 = vmatprep.subr.mxu0 0.0
    %v872 = vand.u32 %v29, 4294901760
    %873 = vmatpush1.msra.mxu0 %v872
    %874 = vmatprep.subr.mxu0 0.0
    %v875 = vand.u32 %v30, 4294901760
    %876 = vmatpush1.msra.mxu0 %v875
    %877 = vmatprep.subr.mxu0 0.0
    %v878 = vand.u32 %v31, 4294901760
    %879 = vmatpush1.msra.mxu0 %v878
    %880 = vmatprep.subr.mxu0 0.0
    %v881 = vand.u32 %v32, 4294901760
    %882 = vmatpush1.msra.mxu0 %v881
    %883 = vmatprep.subr.mxu0 0.0
    %v884 = vand.u32 %v33, 4294901760
    %885 = vmatpush1.msra.mxu0 %v884
    %886 = vmatprep.subr.mxu0 0.0
    %v887 = vand.u32 %v34, 4294901760
    %888 = vmatpush1.msra.mxu0 %v887
    %889 = vmatprep.subr.mxu0 0.0
    %v890 = vand.u32 %v35, 4294901760
    %891 = vmatpush1.msra.mxu0 %v890
    %892 = vmatprep.subr.mxu0 0.0
    %v893 = vand.u32 %v36, 4294901760
    %894 = vmatpush1.msra.mxu0 %v893
    %895 = vmatprep.subr.mxu0 0.0
    %v896 = vand.u32 %v37, 4294901760
    %897 = vmatpush1.msra.mxu0 %v896
    %898 = vmatprep.subr.mxu0 0.0
    %v899 = vand.u32 %v38, 4294901760
    %900 = vmatpush1.msra.mxu0 %v899
    %901 = vmatprep.subr.mxu0 0.0
    %v902 = vand.u32 %v39, 4294901760
    %903 = vmatpush1.msra.mxu0 %v902
    %904 = vmatprep.subr.mxu0 0.0
    %v905 = vand.u32 %v40, 4294901760
    %906 = vmatpush1.msra.mxu0 %v905
    %907 = vmatprep.subr.mxu0 0.0
    %v908 = vand.u32 %v41, 4294901760
    %909 = vmatpush1.msra.mxu0 %v908
    %910 = vmatprep.subr.mxu0 0.0
    %v911 = vand.u32 %v42, 4294901760
    %912 = vmatpush1.msra.mxu0 %v911
    %913 = vmatprep.subr.mxu0 0.0
    %v914 = vand.u32 %v43, 4294901760
    %915 = vmatpush1.msra.mxu0 %v914
    %916 = vmatprep.subr.mxu0 0.0
    %917 = vmatpush1.msra.mxu0 0.0
    %918 = vmatprep.subr.mxu0 0.0
    %919 = vmatpush1.msra.mxu0 0.0
    %920 = vmatprep.subr.mxu0 0.0
    %921 = vmatpush1.msra.mxu0 0.0
    %922 = vmatprep.subr.mxu0 0.0
    %923 = vmatpush1.msra.mxu0 0.0
    %924 = vmatprep.subr.mxu0 0.0
    %925 = vmatpush1.msra.mxu0 0.0
    %926 = vmatprep.subr.mxu0 0.0
    %927 = vmatpush1.msra.mxu0 0.0
    %928 = vmatprep.subr.mxu0 0.0
    %929 = vmatpush1.msra.mxu0 0.0
    %930 = vmatprep.subr.mxu0 0.0
    %931 = vmatpush1.msra.mxu0 0.0
    %932 = vmatprep.subr.mxu0 0.0
    %933 = vmatpush1.msra.mxu0 0.0
    %934 = vmatprep.subr.mxu0 0.0
    %935 = vmatpush1.msra.mxu0 0.0
    %936 = vmatprep.subr.mxu0 0.0
    %937 = vmatpush1.msra.mxu0 0.0
    %938 = vmatprep.subr.mxu0 0.0
    %939 = vmatpush1.msra.mxu0 0.0
    %940 = vmatprep.subr.mxu0 0.0
    %941 = vmatpush1.msra.mxu0 0.0
    %942 = vmatprep.subr.mxu0 0.0
    %943 = vmatpush1.msra.mxu0 0.0
    %944 = vmatprep.subr.mxu0 0.0
    %945 = vmatpush1.msra.mxu0 0.0
    %946 = vmatprep.subr.mxu0 0.0
    %947 = vmatpush1.msra.mxu0 0.0
    %948 = vmatprep.mubr.f32.mxu0 0.0
    %v949 = vand.u32 %v517, 4294901760
    %v950 = vsub.f32 %v517, %v949
    %v951 = vand.u32 %v950, 4294901760
    %952 = vmatmul.mubr.f32.gmra.mrb[0].mxu0 %v951
    %v953 = vpop.f32.mrb[0].mxu0
    %v954 = vadd.f32 %v865, %v953
    %v955 = vpop.f32.mrb[0].mxu0
    %956 = vdwg.mxu0
    %957 = vmatprep.subr.mxu0 0.0
    %v958 = vand.u32 %v28, 4294901760
    %v959 = vsub.f32 %v28, %v958
    %v960 = vand.u32 %v959, 4294901760
    %961 = vmatpush1.msra.mxu0 %v960
    %962 = vmatprep.subr.mxu0 0.0
    %v963 = vand.u32 %v29, 4294901760
    %v964 = vsub.f32 %v29, %v963
    %v965 = vand.u32 %v964, 4294901760
    %966 = vmatpush1.msra.mxu0 %v965
    %967 = vmatprep.subr.mxu0 0.0
    %v968 = vand.u32 %v30, 4294901760
    %v969 = vsub.f32 %v30, %v968
    %v970 = vand.u32 %v969, 4294901760
    %971 = vmatpush1.msra.mxu0 %v970
    %972 = vmatprep.subr.mxu0 0.0
    %v973 = vand.u32 %v31, 4294901760
    %v974 = vsub.f32 %v31, %v973
    %v975 = vand.u32 %v974, 4294901760
    %976 = vmatpush1.msra.mxu0 %v975
    %977 = vmatprep.subr.mxu0 0.0
    %v978 = vand.u32 %v32, 4294901760
    %v979 = vsub.f32 %v32, %v978
    %v980 = vand.u32 %v979, 4294901760
    %981 = vmatpush1.msra.mxu0 %v980
    %982 = vmatprep.subr.mxu0 0.0
    %v983 = vand.u32 %v33, 4294901760
    %v984 = vsub.f32 %v33, %v983
    %v985 = vand.u32 %v984, 4294901760
    %986 = vmatpush1.msra.mxu0 %v985
    %987 = vmatprep.subr.mxu0 0.0
    %v988 = vand.u32 %v34, 4294901760
    %v989 = vsub.f32 %v34, %v988
    %v990 = vand.u32 %v989, 4294901760
    %991 = vmatpush1.msra.mxu0 %v990
    %992 = vmatprep.subr.mxu0 0.0
    %v993 = vand.u32 %v35, 4294901760
    %v994 = vsub.f32 %v35, %v993
    %v995 = vand.u32 %v994, 4294901760
    %996 = vmatpush1.msra.mxu0 %v995
    %997 = vmatprep.subr.mxu0 0.0
    %v998 = vand.u32 %v36, 4294901760
    %v999 = vsub.f32 %v36, %v998
    %v1000 = vand.u32 %v999, 4294901760
    %1001 = vmatpush1.msra.mxu0 %v1000
    %1002 = vmatprep.subr.mxu0 0.0
    %v1003 = vand.u32 %v37, 4294901760
    %v1004 = vsub.f32 %v37, %v1003
    %v1005 = vand.u32 %v1004, 4294901760
    %1006 = vmatpush1.msra.mxu0 %v1005
    %1007 = vmatprep.subr.mxu0 0.0
    %v1008 = vand.u32 %v38, 4294901760
    %v1009 = vsub.f32 %v38, %v1008
    %v1010 = vand.u32 %v1009, 4294901760
    %1011 = vmatpush1.msra.mxu0 %v1010
    %1012 = vmatprep.subr.mxu0 0.0
    %v1013 = vand.u32 %v39, 4294901760
    %v1014 = vsub.f32 %v39, %v1013
    %v1015 = vand.u32 %v1014, 4294901760
    %1016 = vmatpush1.msra.mxu0 %v1015
    %1017 = vmatprep.subr.mxu0 0.0
    %v1018 = vand.u32 %v40, 4294901760
    %v1019 = vsub.f32 %v40, %v1018
    %v1020 = vand.u32 %v1019, 4294901760
    %1021 = vmatpush1.msra.mxu0 %v1020
    %1022 = vmatprep.subr.mxu0 0.0
    %v1023 = vand.u32 %v41, 4294901760
    %v1024 = vsub.f32 %v41, %v1023
    %v1025 = vand.u32 %v1024, 4294901760
    %1026 = vmatpush1.msra.mxu0 %v1025
    %1027 = vmatprep.subr.mxu0 0.0
    %v1028 = vand.u32 %v42, 4294901760
    %v1029 = vsub.f32 %v42, %v1028
    %v1030 = vand.u32 %v1029, 4294901760
    %1031 = vmatpush1.msra.mxu0 %v1030
    %1032 = vmatprep.subr.mxu0 0.0
    %v1033 = vand.u32 %v43, 4294901760
    %v1034 = vsub.f32 %v43, %v1033
    %v1035 = vand.u32 %v1034, 4294901760
    %1036 = vmatpush1.msra.mxu0 %v1035
    %1037 = vmatprep.subr.mxu0 0.0
    %1038 = vmatpush1.msra.mxu0 0.0
    %1039 = vmatprep.subr.mxu0 0.0
    %1040 = vmatpush1.msra.mxu0 0.0
    %1041 = vmatprep.subr.mxu0 0.0
    %1042 = vmatpush1.msra.mxu0 0.0
    %1043 = vmatprep.subr.mxu0 0.0
    %1044 = vmatpush1.msra.mxu0 0.0
    %1045 = vmatprep.subr.mxu0 0.0
    %1046 = vmatpush1.msra.mxu0 0.0
    %1047 = vmatprep.subr.mxu0 0.0
    %1048 = vmatpush1.msra.mxu0 0.0
    %1049 = vmatprep.subr.mxu0 0.0
    %1050 = vmatpush1.msra.mxu0 0.0
    %1051 = vmatprep.subr.mxu0 0.0
    %1052 = vmatpush1.msra.mxu0 0.0
    %1053 = vmatprep.subr.mxu0 0.0
    %1054 = vmatpush1.msra.mxu0 0.0
    %1055 = vmatprep.subr.mxu0 0.0
    %1056 = vmatpush1.msra.mxu0 0.0
    %1057 = vmatprep.subr.mxu0 0.0
    %1058 = vmatpush1.msra.mxu0 0.0
    %1059 = vmatprep.subr.mxu0 0.0
    %1060 = vmatpush1.msra.mxu0 0.0
    %1061 = vmatprep.subr.mxu0 0.0
    %1062 = vmatpush1.msra.mxu0 0.0
    %1063 = vmatprep.subr.mxu0 0.0
    %1064 = vmatpush1.msra.mxu0 0.0
    %1065 = vmatprep.subr.mxu0 0.0
    %1066 = vmatpush1.msra.mxu0 0.0
    %1067 = vmatprep.subr.mxu0 0.0
    %1068 = vmatpush1.msra.mxu0 0.0
    %1069 = vmatprep.mubr.f32.mxu0 0.0
    %v1070 = vand.u32 %v517, 4294901760
    %1071 = vmatmul.mubr.f32.gmra.mrb[0].mxu0 %v1070
    %v1072 = vpop.f32.mrb[0].mxu0
    %v1073 = vadd.f32 %v954, %v1072
    %v1074 = vpop.f32.mrb[0].mxu0
    %1075 = vdwg.mxu0
    %1076 = vmatprep.subr.mxu0 0.0
    %v1077 = vand.u32 %v28, 4294901760
    %1078 = vmatpush1.msra.mxu0 %v1077
    %1079 = vmatprep.subr.mxu0 0.0
    %v1080 = vand.u32 %v29, 4294901760
    %1081 = vmatpush1.msra.mxu0 %v1080
    %1082 = vmatprep.subr.mxu0 0.0
    %v1083 = vand.u32 %v30, 4294901760
    %1084 = vmatpush1.msra.mxu0 %v1083
    %1085 = vmatprep.subr.mxu0 0.0
    %v1086 = vand.u32 %v31, 4294901760
    %1087 = vmatpush1.msra.mxu0 %v1086
    %1088 = vmatprep.subr.mxu0 0.0
    %v1089 = vand.u32 %v32, 4294901760
    %1090 = vmatpush1.msra.mxu0 %v1089
    %1091 = vmatprep.subr.mxu0 0.0
    %v1092 = vand.u32 %v33, 4294901760
    %1093 = vmatpush1.msra.mxu0 %v1092
    %1094 = vmatprep.subr.mxu0 0.0
    %v1095 = vand.u32 %v34, 4294901760
    %1096 = vmatpush1.msra.mxu0 %v1095
    %1097 = vmatprep.subr.mxu0 0.0
    %v1098 = vand.u32 %v35, 4294901760
    %1099 = vmatpush1.msra.mxu0 %v1098
    %1100 = vmatprep.subr.mxu0 0.0
    %v1101 = vand.u32 %v36, 4294901760
    %1102 = vmatpush1.msra.mxu0 %v1101
    %1103 = vmatprep.subr.mxu0 0.0
    %v1104 = vand.u32 %v37, 4294901760
    %1105 = vmatpush1.msra.mxu0 %v1104
    %1106 = vmatprep.subr.mxu0 0.0
    %v1107 = vand.u32 %v38, 4294901760
    %1108 = vmatpush1.msra.mxu0 %v1107
    %1109 = vmatprep.subr.mxu0 0.0
    %v1110 = vand.u32 %v39, 4294901760
    %1111 = vmatpush1.msra.mxu0 %v1110
    %1112 = vmatprep.subr.mxu0 0.0
    %v1113 = vand.u32 %v40, 4294901760
    %1114 = vmatpush1.msra.mxu0 %v1113
    %1115 = vmatprep.subr.mxu0 0.0
    %v1116 = vand.u32 %v41, 4294901760
    %1117 = vmatpush1.msra.mxu0 %v1116
    %1118 = vmatprep.subr.mxu0 0.0
    %v1119 = vand.u32 %v42, 4294901760
    %1120 = vmatpush1.msra.mxu0 %v1119
    %1121 = vmatprep.subr.mxu0 0.0
    %v1122 = vand.u32 %v43, 4294901760
    %1123 = vmatpush1.msra.mxu0 %v1122
    %1124 = vmatprep.subr.mxu0 0.0
    %1125 = vmatpush1.msra.mxu0 0.0
    %1126 = vmatprep.subr.mxu0 0.0
    %1127 = vmatpush1.msra.mxu0 0.0
    %1128 = vmatprep.subr.mxu0 0.0
    %1129 = vmatpush1.msra.mxu0 0.0
    %1130 = vmatprep.subr.mxu0 0.0
    %1131 = vmatpush1.msra.mxu0 0.0
    %1132 = vmatprep.subr.mxu0 0.0
    %1133 = vmatpush1.msra.mxu0 0.0
    %1134 = vmatprep.subr.mxu0 0.0
    %1135 = vmatpush1.msra.mxu0 0.0
    %1136 = vmatprep.subr.mxu0 0.0
    %1137 = vmatpush1.msra.mxu0 0.0
    %1138 = vmatprep.subr.mxu0 0.0
    %1139 = vmatpush1.msra.mxu0 0.0
    %1140 = vmatprep.subr.mxu0 0.0
    %1141 = vmatpush1.msra.mxu0 0.0
    %1142 = vmatprep.subr.mxu0 0.0
    %1143 = vmatpush1.msra.mxu0 0.0
    %1144 = vmatprep.subr.mxu0 0.0
    %1145 = vmatpush1.msra.mxu0 0.0
    %1146 = vmatprep.subr.mxu0 0.0
    %1147 = vmatpush1.msra.mxu0 0.0
    %1148 = vmatprep.subr.mxu0 0.0
    %1149 = vmatpush1.msra.mxu0 0.0
    %1150 = vmatprep.subr.mxu0 0.0
    %1151 = vmatpush1.msra.mxu0 0.0
    %1152 = vmatprep.subr.mxu0 0.0
    %1153 = vmatpush1.msra.mxu0 0.0
    %1154 = vmatprep.subr.mxu0 0.0
    %1155 = vmatpush1.msra.mxu0 0.0
    %1156 = vmatprep.mubr.f32.mxu0 0.0
    %v1157 = vand.u32 %v517, 4294901760
    %1158 = vmatmul.mubr.f32.gmra.mrb[0].mxu0 %v1157
    %v1159 = vpop.f32.mrb[0].mxu0
    %v1160 = vadd.f32 %v1073, %v1159
    %v1161 = vpop.f32.mrb[0].mxu0
    %1162 = vdwg.mxu0
    %v1163 = vmax.f32 %v1160, 0.0
    %v1164 = vlaneseq
    %v1165 = vshrl.u32 %v1164, 7
    %v1166 = vsub.s32 0, %v1165
    %v1167 = vrot.slane %v62, %v1166
    %1168 = vmatprep.subr.mxu0 0.0
    %v1169 = vand.u32 %v44, 4294901760
    %1170 = vmatpush1.msra.mxu0 %v1169
    %1171 = vmatprep.subr.mxu0 0.0
    %v1172 = vand.u32 %v45, 4294901760
    %1173 = vmatpush1.msra.mxu0 %v1172
    %1174 = vmatprep.subr.mxu0 0.0
    %v1175 = vand.u32 %v46, 4294901760
    %1176 = vmatpush1.msra.mxu0 %v1175
    %1177 = vmatprep.subr.mxu0 0.0
    %v1178 = vand.u32 %v47, 4294901760
    %1179 = vmatpush1.msra.mxu0 %v1178
    %1180 = vmatprep.subr.mxu0 0.0
    %v1181 = vand.u32 %v48, 4294901760
    %1182 = vmatpush1.msra.mxu0 %v1181
    %1183 = vmatprep.subr.mxu0 0.0
    %v1184 = vand.u32 %v49, 4294901760
    %1185 = vmatpush1.msra.mxu0 %v1184
    %1186 = vmatprep.subr.mxu0 0.0
    %v1187 = vand.u32 %v50, 4294901760
    %1188 = vmatpush1.msra.mxu0 %v1187
    %1189 = vmatprep.subr.mxu0 0.0
    %v1190 = vand.u32 %v51, 4294901760
    %1191 = vmatpush1.msra.mxu0 %v1190
    %1192 = vmatprep.subr.mxu0 0.0
    %v1193 = vand.u32 %v52, 4294901760
    %1194 = vmatpush1.msra.mxu0 %v1193
    %1195 = vmatprep.subr.mxu0 0.0
    %v1196 = vand.u32 %v53, 4294901760
    %1197 = vmatpush1.msra.mxu0 %v1196
    %1198 = vmatprep.subr.mxu0 0.0
    %v1199 = vand.u32 %v54, 4294901760
    %1200 = vmatpush1.msra.mxu0 %v1199
    %1201 = vmatprep.subr.mxu0 0.0
    %v1202 = vand.u32 %v55, 4294901760
    %1203 = vmatpush1.msra.mxu0 %v1202
    %1204 = vmatprep.subr.mxu0 0.0
    %v1205 = vand.u32 %v56, 4294901760
    %1206 = vmatpush1.msra.mxu0 %v1205
    %1207 = vmatprep.subr.mxu0 0.0
    %v1208 = vand.u32 %v57, 4294901760
    %1209 = vmatpush1.msra.mxu0 %v1208
    %1210 = vmatprep.subr.mxu0 0.0
    %v1211 = vand.u32 %v58, 4294901760
    %1212 = vmatpush1.msra.mxu0 %v1211
    %1213 = vmatprep.subr.mxu0 0.0
    %v1214 = vand.u32 %v59, 4294901760
    %1215 = vmatpush1.msra.mxu0 %v1214
    %1216 = vmatprep.subr.mxu0 0.0
    %1217 = vmatpush1.msra.mxu0 0.0
    %1218 = vmatprep.subr.mxu0 0.0
    %1219 = vmatpush1.msra.mxu0 0.0
    %1220 = vmatprep.subr.mxu0 0.0
    %1221 = vmatpush1.msra.mxu0 0.0
    %1222 = vmatprep.subr.mxu0 0.0
    %1223 = vmatpush1.msra.mxu0 0.0
    %1224 = vmatprep.subr.mxu0 0.0
    %1225 = vmatpush1.msra.mxu0 0.0
    %1226 = vmatprep.subr.mxu0 0.0
    %1227 = vmatpush1.msra.mxu0 0.0
    %1228 = vmatprep.subr.mxu0 0.0
    %1229 = vmatpush1.msra.mxu0 0.0
    %1230 = vmatprep.subr.mxu0 0.0
    %1231 = vmatpush1.msra.mxu0 0.0
    %1232 = vmatprep.subr.mxu0 0.0
    %1233 = vmatpush1.msra.mxu0 0.0
    %1234 = vmatprep.subr.mxu0 0.0
    %1235 = vmatpush1.msra.mxu0 0.0
    %1236 = vmatprep.subr.mxu0 0.0
    %1237 = vmatpush1.msra.mxu0 0.0
    %1238 = vmatprep.subr.mxu0 0.0
    %1239 = vmatpush1.msra.mxu0 0.0
    %1240 = vmatprep.subr.mxu0 0.0
    %1241 = vmatpush1.msra.mxu0 0.0
    %1242 = vmatprep.subr.mxu0 0.0
    %1243 = vmatpush1.msra.mxu0 0.0
    %1244 = vmatprep.subr.mxu0 0.0
    %1245 = vmatpush1.msra.mxu0 0.0
    %1246 = vmatprep.subr.mxu0 0.0
    %1247 = vmatpush1.msra.mxu0 0.0
    %1248 = vmatprep.mubr.f32.mxu0 0.0
    %v1249 = vand.u32 %v1163, 4294901760
    %v1250 = vsub.f32 %v1163, %v1249
    %v1251 = vand.u32 %v1250, 4294901760
    %v1252 = vsub.f32 %v1250, %v1251
    %v1253 = vand.u32 %v1252, 4294901760
    %1254 = vmatmul.mubr.f32.gmra.mrb[0].mxu0 %v1253
    %v1255 = vpop.f32.mrb[0].mxu0
    %v1256 = vadd.f32 %v1167, %v1255
    %v1257 = vpop.f32.mrb[0].mxu0
    %1258 = vdwg.mxu0
    %1259 = vmatprep.subr.mxu0 0.0
    %v1260 = vand.u32 %v44, 4294901760
    %v1261 = vsub.f32 %v44, %v1260
    %v1262 = vand.u32 %v1261, 4294901760
    %v1263 = vsub.f32 %v1261, %v1262
    %v1264 = vand.u32 %v1263, 4294901760
    %1265 = vmatpush1.msra.mxu0 %v1264
    %1266 = vmatprep.subr.mxu0 0.0
    %v1267 = vand.u32 %v45, 4294901760
    %v1268 = vsub.f32 %v45, %v1267
    %v1269 = vand.u32 %v1268, 4294901760
    %v1270 = vsub.f32 %v1268, %v1269
    %v1271 = vand.u32 %v1270, 4294901760
    %1272 = vmatpush1.msra.mxu0 %v1271
    %1273 = vmatprep.subr.mxu0 0.0
    %v1274 = vand.u32 %v46, 4294901760
    %v1275 = vsub.f32 %v46, %v1274
    %v1276 = vand.u32 %v1275, 4294901760
    %v1277 = vsub.f32 %v1275, %v1276
    %v1278 = vand.u32 %v1277, 4294901760
    %1279 = vmatpush1.msra.mxu0 %v1278
    %1280 = vmatprep.subr.mxu0 0.0
    %v1281 = vand.u32 %v47, 4294901760
    %v1282 = vsub.f32 %v47, %v1281
    %v1283 = vand.u32 %v1282, 4294901760
    %v1284 = vsub.f32 %v1282, %v1283
    %v1285 = vand.u32 %v1284, 4294901760
    %1286 = vmatpush1.msra.mxu0 %v1285
    %1287 = vmatprep.subr.mxu0 0.0
    %v1288 = vand.u32 %v48, 4294901760
    %v1289 = vsub.f32 %v48, %v1288
    %v1290 = vand.u32 %v1289, 4294901760
    %v1291 = vsub.f32 %v1289, %v1290
    %v1292 = vand.u32 %v1291, 4294901760
    %1293 = vmatpush1.msra.mxu0 %v1292
    %1294 = vmatprep.subr.mxu0 0.0
    %v1295 = vand.u32 %v49, 4294901760
    %v1296 = vsub.f32 %v49, %v1295
    %v1297 = vand.u32 %v1296, 4294901760
    %v1298 = vsub.f32 %v1296, %v1297
    %v1299 = vand.u32 %v1298, 4294901760
    %1300 = vmatpush1.msra.mxu0 %v1299
    %1301 = vmatprep.subr.mxu0 0.0
    %v1302 = vand.u32 %v50, 4294901760
    %v1303 = vsub.f32 %v50, %v1302
    %v1304 = vand.u32 %v1303, 4294901760
    %v1305 = vsub.f32 %v1303, %v1304
    %v1306 = vand.u32 %v1305, 4294901760
    %1307 = vmatpush1.msra.mxu0 %v1306
    %1308 = vmatprep.subr.mxu0 0.0
    %v1309 = vand.u32 %v51, 4294901760
    %v1310 = vsub.f32 %v51, %v1309
    %v1311 = vand.u32 %v1310, 4294901760
    %v1312 = vsub.f32 %v1310, %v1311
    %v1313 = vand.u32 %v1312, 4294901760
    %1314 = vmatpush1.msra.mxu0 %v1313
    %1315 = vmatprep.subr.mxu0 0.0
    %v1316 = vand.u32 %v52, 4294901760
    %v1317 = vsub.f32 %v52, %v1316
    %v1318 = vand.u32 %v1317, 4294901760
    %v1319 = vsub.f32 %v1317, %v1318
    %v1320 = vand.u32 %v1319, 4294901760
    %1321 = vmatpush1.msra.mxu0 %v1320
    %1322 = vmatprep.subr.mxu0 0.0
    %v1323 = vand.u32 %v53, 4294901760
    %v1324 = vsub.f32 %v53, %v1323
    %v1325 = vand.u32 %v1324, 4294901760
    %v1326 = vsub.f32 %v1324, %v1325
    %v1327 = vand.u32 %v1326, 4294901760
    %1328 = vmatpush1.msra.mxu0 %v1327
    %1329 = vmatprep.subr.mxu0 0.0
    %v1330 = vand.u32 %v54, 4294901760
    %v1331 = vsub.f32 %v54, %v1330
    %v1332 = vand.u32 %v1331, 4294901760
    %v1333 = vsub.f32 %v1331, %v1332
    %v1334 = vand.u32 %v1333, 4294901760
    %1335 = vmatpush1.msra.mxu0 %v1334
    %1336 = vmatprep.subr.mxu0 0.0
    %v1337 = vand.u32 %v55, 4294901760
    %v1338 = vsub.f32 %v55, %v1337
    %v1339 = vand.u32 %v1338, 4294901760
    %v1340 = vsub.f32 %v1338, %v1339
    %v1341 = vand.u32 %v1340, 4294901760
    %1342 = vmatpush1.msra.mxu0 %v1341
    %1343 = vmatprep.subr.mxu0 0.0
    %v1344 = vand.u32 %v56, 4294901760
    %v1345 = vsub.f32 %v56, %v1344
    %v1346 = vand.u32 %v1345, 4294901760
    %v1347 = vsub.f32 %v1345, %v1346
    %v1348 = vand.u32 %v1347, 4294901760
    %1349 = vmatpush1.msra.mxu0 %v1348
    %1350 = vmatprep.subr.mxu0 0.0
    %v1351 = vand.u32 %v57, 4294901760
    %v1352 = vsub.f32 %v57, %v1351
    %v1353 = vand.u32 %v1352, 4294901760
    %v1354 = vsub.f32 %v1352, %v1353
    %v1355 = vand.u32 %v1354, 4294901760
    %1356 = vmatpush1.msra.mxu0 %v1355
    %1357 = vmatprep.subr.mxu0 0.0
    %v1358 = vand.u32 %v58, 4294901760
    %v1359 = vsub.f32 %v58, %v1358
    %v1360 = vand.u32 %v1359, 4294901760
    %v1361 = vsub.f32 %v1359, %v1360
    %v1362 = vand.u32 %v1361, 4294901760
    %1363 = vmatpush1.msra.mxu0 %v1362
    %1364 = vmatprep.subr.mxu0 0.0
    %v1365 = vand.u32 %v59, 4294901760
    %v1366 = vsub.f32 %v59, %v1365
    %v1367 = vand.u32 %v1366, 4294901760
    %v1368 = vsub.f32 %v1366, %v1367
    %v1369 = vand.u32 %v1368, 4294901760
    %1370 = vmatpush1.msra.mxu0 %v1369
    %1371 = vmatprep.subr.mxu0 0.0
    %1372 = vmatpush1.msra.mxu0 0.0
    %1373 = vmatprep.subr.mxu0 0.0
    %1374 = vmatpush1.msra.mxu0 0.0
    %1375 = vmatprep.subr.mxu0 0.0
    %1376 = vmatpush1.msra.mxu0 0.0
    %1377 = vmatprep.subr.mxu0 0.0
    %1378 = vmatpush1.msra.mxu0 0.0
    %1379 = vmatprep.subr.mxu0 0.0
    %1380 = vmatpush1.msra.mxu0 0.0
    %1381 = vmatprep.subr.mxu0 0.0
    %1382 = vmatpush1.msra.mxu0 0.0
    %1383 = vmatprep.subr.mxu0 0.0
    %1384 = vmatpush1.msra.mxu0 0.0
    %1385 = vmatprep.subr.mxu0 0.0
    %1386 = vmatpush1.msra.mxu0 0.0
    %1387 = vmatprep.subr.mxu0 0.0
    %1388 = vmatpush1.msra.mxu0 0.0
    %1389 = vmatprep.subr.mxu0 0.0
    %1390 = vmatpush1.msra.mxu0 0.0
    %1391 = vmatprep.subr.mxu0 0.0
    %1392 = vmatpush1.msra.mxu0 0.0
    %1393 = vmatprep.subr.mxu0 0.0
    %1394 = vmatpush1.msra.mxu0 0.0
    %1395 = vmatprep.subr.mxu0 0.0
    %1396 = vmatpush1.msra.mxu0 0.0
    %1397 = vmatprep.subr.mxu0 0.0
    %1398 = vmatpush1.msra.mxu0 0.0
    %1399 = vmatprep.subr.mxu0 0.0
    %1400 = vmatpush1.msra.mxu0 0.0
    %1401 = vmatprep.subr.mxu0 0.0
    %1402 = vmatpush1.msra.mxu0 0.0
    %1403 = vmatprep.mubr.f32.mxu0 0.0
    %v1404 = vand.u32 %v1163, 4294901760
    %1405 = vmatmul.mubr.f32.gmra.mrb[0].mxu0 %v1404
    %v1406 = vpop.f32.mrb[0].mxu0
    %v1407 = vadd.f32 %v1256, %v1406
    %v1408 = vpop.f32.mrb[0].mxu0
    %1409 = vdwg.mxu0
    %1410 = vmatprep.subr.mxu0 0.0
    %v1411 = vand.u32 %v44, 4294901760
    %v1412 = vsub.f32 %v44, %v1411
    %1413 = vmatpush1.msra.mxu0 %v1412
    %1414 = vmatprep.subr.mxu0 0.0
    %v1415 = vand.u32 %v45, 4294901760
    %v1416 = vsub.f32 %v45, %v1415
    %1417 = vmatpush1.msra.mxu0 %v1416
    %1418 = vmatprep.subr.mxu0 0.0
    %v1419 = vand.u32 %v46, 4294901760
    %v1420 = vsub.f32 %v46, %v1419
    %1421 = vmatpush1.msra.mxu0 %v1420
    %1422 = vmatprep.subr.mxu0 0.0
    %v1423 = vand.u32 %v47, 4294901760
    %v1424 = vsub.f32 %v47, %v1423
    %1425 = vmatpush1.msra.mxu0 %v1424
    %1426 = vmatprep.subr.mxu0 0.0
    %v1427 = vand.u32 %v48, 4294901760
    %v1428 = vsub.f32 %v48, %v1427
    %1429 = vmatpush1.msra.mxu0 %v1428
    %1430 = vmatprep.subr.mxu0 0.0
    %v1431 = vand.u32 %v49, 4294901760
    %v1432 = vsub.f32 %v49, %v1431
    %1433 = vmatpush1.msra.mxu0 %v1432
    %1434 = vmatprep.subr.mxu0 0.0
    %v1435 = vand.u32 %v50, 4294901760
    %v1436 = vsub.f32 %v50, %v1435
    %1437 = vmatpush1.msra.mxu0 %v1436
    %1438 = vmatprep.subr.mxu0 0.0
    %v1439 = vand.u32 %v51, 4294901760
    %v1440 = vsub.f32 %v51, %v1439
    %1441 = vmatpush1.msra.mxu0 %v1440
    %1442 = vmatprep.subr.mxu0 0.0
    %v1443 = vand.u32 %v52, 4294901760
    %v1444 = vsub.f32 %v52, %v1443
    %1445 = vmatpush1.msra.mxu0 %v1444
    %1446 = vmatprep.subr.mxu0 0.0
    %v1447 = vand.u32 %v53, 4294901760
    %v1448 = vsub.f32 %v53, %v1447
    %1449 = vmatpush1.msra.mxu0 %v1448
    %1450 = vmatprep.subr.mxu0 0.0
    %v1451 = vand.u32 %v54, 4294901760
    %v1452 = vsub.f32 %v54, %v1451
    %1453 = vmatpush1.msra.mxu0 %v1452
    %1454 = vmatprep.subr.mxu0 0.0
    %v1455 = vand.u32 %v55, 4294901760
    %v1456 = vsub.f32 %v55, %v1455
    %1457 = vmatpush1.msra.mxu0 %v1456
    %1458 = vmatprep.subr.mxu0 0.0
    %v1459 = vand.u32 %v56, 4294901760
    %v1460 = vsub.f32 %v56, %v1459
    %1461 = vmatpush1.msra.mxu0 %v1460
    %1462 = vmatprep.subr.mxu0 0.0
    %v1463 = vand.u32 %v57, 4294901760
    %v1464 = vsub.f32 %v57, %v1463
    %1465 = vmatpush1.msra.mxu0 %v1464
    %1466 = vmatprep.subr.mxu0 0.0
    %v1467 = vand.u32 %v58, 4294901760
    %v1468 = vsub.f32 %v58, %v1467
    %1469 = vmatpush1.msra.mxu0 %v1468
    %1470 = vmatprep.subr.mxu0 0.0
    %v1471 = vand.u32 %v59, 4294901760
    %v1472 = vsub.f32 %v59, %v1471
    %1473 = vmatpush1.msra.mxu0 %v1472
    %1474 = vmatprep.subr.mxu0 0.0
    %1475 = vmatpush1.msra.mxu0 0.0
    %1476 = vmatprep.subr.mxu0 0.0
    %1477 = vmatpush1.msra.mxu0 0.0
    %1478 = vmatprep.subr.mxu0 0.0
    %1479 = vmatpush1.msra.mxu0 0.0
    %1480 = vmatprep.subr.mxu0 0.0
    %1481 = vmatpush1.msra.mxu0 0.0
    %1482 = vmatprep.subr.mxu0 0.0
    %1483 = vmatpush1.msra.mxu0 0.0
    %1484 = vmatprep.subr.mxu0 0.0
    %1485 = vmatpush1.msra.mxu0 0.0
    %1486 = vmatprep.subr.mxu0 0.0
    %1487 = vmatpush1.msra.mxu0 0.0
    %1488 = vmatprep.subr.mxu0 0.0
    %1489 = vmatpush1.msra.mxu0 0.0
    %1490 = vmatprep.subr.mxu0 0.0
    %1491 = vmatpush1.msra.mxu0 0.0
    %1492 = vmatprep.subr.mxu0 0.0
    %1493 = vmatpush1.msra.mxu0 0.0
    %1494 = vmatprep.subr.mxu0 0.0
    %1495 = vmatpush1.msra.mxu0 0.0
    %1496 = vmatprep.subr.mxu0 0.0
    %1497 = vmatpush1.msra.mxu0 0.0
    %1498 = vmatprep.subr.mxu0 0.0
    %1499 = vmatpush1.msra.mxu0 0.0
    %1500 = vmatprep.subr.mxu0 0.0
    %1501 = vmatpush1.msra.mxu0 0.0
    %1502 = vmatprep.subr.mxu0 0.0
    %1503 = vmatpush1.msra.mxu0 0.0
    %1504 = vmatprep.subr.mxu0 0.0
    %1505 = vmatpush1.msra.mxu0 0.0
    %1506 = vmatprep.mubr.f32.mxu0 0.0
    %v1507 = vand.u32 %v1163, 4294901760
    %v1508 = vsub.f32 %v1163, %v1507
    %1509 = vmatmul.mubr.f32.gmra.mrb[0].mxu0 %v1508
    %v1510 = vpop.f32.mrb[0].mxu0
    %v1511 = vadd.f32 %v1407, %v1510
    %v1512 = vpop.f32.mrb[0].mxu0
    %1513 = vdwg.mxu0
    %1514 = vmatprep.subr.mxu0 0.0
    %v1515 = vand.u32 %v44, 4294901760
    %1516 = vmatpush1.msra.mxu0 %v1515
    %1517 = vmatprep.subr.mxu0 0.0
    %v1518 = vand.u32 %v45, 4294901760
    %1519 = vmatpush1.msra.mxu0 %v1518
    %1520 = vmatprep.subr.mxu0 0.0
    %v1521 = vand.u32 %v46, 4294901760
    %1522 = vmatpush1.msra.mxu0 %v1521
    %1523 = vmatprep.subr.mxu0 0.0
    %v1524 = vand.u32 %v47, 4294901760
    %1525 = vmatpush1.msra.mxu0 %v1524
    %1526 = vmatprep.subr.mxu0 0.0
    %v1527 = vand.u32 %v48, 4294901760
    %1528 = vmatpush1.msra.mxu0 %v1527
    %1529 = vmatprep.subr.mxu0 0.0
    %v1530 = vand.u32 %v49, 4294901760
    %1531 = vmatpush1.msra.mxu0 %v1530
    %1532 = vmatprep.subr.mxu0 0.0
    %v1533 = vand.u32 %v50, 4294901760
    %1534 = vmatpush1.msra.mxu0 %v1533
    %1535 = vmatprep.subr.mxu0 0.0
    %v1536 = vand.u32 %v51, 4294901760
    %1537 = vmatpush1.msra.mxu0 %v1536
    %1538 = vmatprep.subr.mxu0 0.0
    %v1539 = vand.u32 %v52, 4294901760
    %1540 = vmatpush1.msra.mxu0 %v1539
    %1541 = vmatprep.subr.mxu0 0.0
    %v1542 = vand.u32 %v53, 4294901760
    %1543 = vmatpush1.msra.mxu0 %v1542
    %1544 = vmatprep.subr.mxu0 0.0
    %v1545 = vand.u32 %v54, 4294901760
    %1546 = vmatpush1.msra.mxu0 %v1545
    %1547 = vmatprep.subr.mxu0 0.0
    %v1548 = vand.u32 %v55, 4294901760
    %1549 = vmatpush1.msra.mxu0 %v1548
    %1550 = vmatprep.subr.mxu0 0.0
    %v1551 = vand.u32 %v56, 4294901760
    %1552 = vmatpush1.msra.mxu0 %v1551
    %1553 = vmatprep.subr.mxu0 0.0
    %v1554 = vand.u32 %v57, 4294901760
    %1555 = vmatpush1.msra.mxu0 %v1554
    %1556 = vmatprep.subr.mxu0 0.0
    %v1557 = vand.u32 %v58, 4294901760
    %1558 = vmatpush1.msra.mxu0 %v1557
    %1559 = vmatprep.subr.mxu0 0.0
    %v1560 = vand.u32 %v59, 4294901760
    %1561 = vmatpush1.msra.mxu0 %v1560
    %1562 = vmatprep.subr.mxu0 0.0
    %1563 = vmatpush1.msra.mxu0 0.0
    %1564 = vmatprep.subr.mxu0 0.0
    %1565 = vmatpush1.msra.mxu0 0.0
    %1566 = vmatprep.subr.mxu0 0.0
    %1567 = vmatpush1.msra.mxu0 0.0
    %1568 = vmatprep.subr.mxu0 0.0
    %1569 = vmatpush1.msra.mxu0 0.0
    %1570 = vmatprep.subr.mxu0 0.0
    %1571 = vmatpush1.msra.mxu0 0.0
    %1572 = vmatprep.subr.mxu0 0.0
    %1573 = vmatpush1.msra.mxu0 0.0
    %1574 = vmatprep.subr.mxu0 0.0
    %1575 = vmatpush1.msra.mxu0 0.0
    %1576 = vmatprep.subr.mxu0 0.0
    %1577 = vmatpush1.msra.mxu0 0.0
    %1578 = vmatprep.subr.mxu0 0.0
    %1579 = vmatpush1.msra.mxu0 0.0
    %1580 = vmatprep.subr.mxu0 0.0
    %1581 = vmatpush1.msra.mxu0 0.0
    %1582 = vmatprep.subr.mxu0 0.0
    %1583 = vmatpush1.msra.mxu0 0.0
    %1584 = vmatprep.subr.mxu0 0.0
    %1585 = vmatpush1.msra.mxu0 0.0
    %1586 = vmatprep.subr.mxu0 0.0
    %1587 = vmatpush1.msra.mxu0 0.0
    %1588 = vmatprep.subr.mxu0 0.0
    %1589 = vmatpush1.msra.mxu0 0.0
    %1590 = vmatprep.subr.mxu0 0.0
    %1591 = vmatpush1.msra.mxu0 0.0
    %1592 = vmatprep.subr.mxu0 0.0
    %1593 = vmatpush1.msra.mxu0 0.0
    %1594 = vmatprep.mubr.f32.mxu0 0.0
    %v1595 = vand.u32 %v1163, 4294901760
    %v1596 = vsub.f32 %v1163, %v1595
    %v1597 = vand.u32 %v1596, 4294901760
    %1598 = vmatmul.mubr.f32.gmra.mrb[0].mxu0 %v1597
    %v1599 = vpop.f32.mrb[0].mxu0
    %v1600 = vadd.f32 %v1511, %v1599
    %v1601 = vpop.f32.mrb[0].mxu0
    %1602 = vdwg.mxu0
    %1603 = vmatprep.subr.mxu0 0.0
    %v1604 = vand.u32 %v44, 4294901760
    %v1605 = vsub.f32 %v44, %v1604
    %v1606 = vand.u32 %v1605, 4294901760
    %1607 = vmatpush1.msra.mxu0 %v1606
    %1608 = vmatprep.subr.mxu0 0.0
    %v1609 = vand.u32 %v45, 4294901760
    %v1610 = vsub.f32 %v45, %v1609
    %v1611 = vand.u32 %v1610, 4294901760
    %1612 = vmatpush1.msra.mxu0 %v1611
    %1613 = vmatprep.subr.mxu0 0.0
    %v1614 = vand.u32 %v46, 4294901760
    %v1615 = vsub.f32 %v46, %v1614
    %v1616 = vand.u32 %v1615, 4294901760
    %1617 = vmatpush1.msra.mxu0 %v1616
    %1618 = vmatprep.subr.mxu0 0.0
    %v1619 = vand.u32 %v47, 4294901760
    %v1620 = vsub.f32 %v47, %v1619
    %v1621 = vand.u32 %v1620, 4294901760
    %1622 = vmatpush1.msra.mxu0 %v1621
    %1623 = vmatprep.subr.mxu0 0.0
    %v1624 = vand.u32 %v48, 4294901760
    %v1625 = vsub.f32 %v48, %v1624
    %v1626 = vand.u32 %v1625, 4294901760
    %1627 = vmatpush1.msra.mxu0 %v1626
    %1628 = vmatprep.subr.mxu0 0.0
    %v1629 = vand.u32 %v49, 4294901760
    %v1630 = vsub.f32 %v49, %v1629
    %v1631 = vand.u32 %v1630, 4294901760
    %1632 = vmatpush1.msra.mxu0 %v1631
    %1633 = vmatprep.subr.mxu0 0.0
    %v1634 = vand.u32 %v50, 4294901760
    %v1635 = vsub.f32 %v50, %v1634
    %v1636 = vand.u32 %v1635, 4294901760
    %1637 = vmatpush1.msra.mxu0 %v1636
    %1638 = vmatprep.subr.mxu0 0.0
    %v1639 = vand.u32 %v51, 4294901760
    %v1640 = vsub.f32 %v51, %v1639
    %v1641 = vand.u32 %v1640, 4294901760
    %1642 = vmatpush1.msra.mxu0 %v1641
    %1643 = vmatprep.subr.mxu0 0.0
    %v1644 = vand.u32 %v52, 4294901760
    %v1645 = vsub.f32 %v52, %v1644
    %v1646 = vand.u32 %v1645, 4294901760
    %1647 = vmatpush1.msra.mxu0 %v1646
    %1648 = vmatprep.subr.mxu0 0.0
    %v1649 = vand.u32 %v53, 4294901760
    %v1650 = vsub.f32 %v53, %v1649
    %v1651 = vand.u32 %v1650, 4294901760
    %1652 = vmatpush1.msra.mxu0 %v1651
    %1653 = vmatprep.subr.mxu0 0.0
    %v1654 = vand.u32 %v54, 4294901760
    %v1655 = vsub.f32 %v54, %v1654
    %v1656 = vand.u32 %v1655, 4294901760
    %1657 = vmatpush1.msra.mxu0 %v1656
    %1658 = vmatprep.subr.mxu0 0.0
    %v1659 = vand.u32 %v55, 4294901760
    %v1660 = vsub.f32 %v55, %v1659
    %v1661 = vand.u32 %v1660, 4294901760
    %1662 = vmatpush1.msra.mxu0 %v1661
    %1663 = vmatprep.subr.mxu0 0.0
    %v1664 = vand.u32 %v56, 4294901760
    %v1665 = vsub.f32 %v56, %v1664
    %v1666 = vand.u32 %v1665, 4294901760
    %1667 = vmatpush1.msra.mxu0 %v1666
    %1668 = vmatprep.subr.mxu0 0.0
    %v1669 = vand.u32 %v57, 4294901760
    %v1670 = vsub.f32 %v57, %v1669
    %v1671 = vand.u32 %v1670, 4294901760
    %1672 = vmatpush1.msra.mxu0 %v1671
    %1673 = vmatprep.subr.mxu0 0.0
    %v1674 = vand.u32 %v58, 4294901760
    %v1675 = vsub.f32 %v58, %v1674
    %v1676 = vand.u32 %v1675, 4294901760
    %1677 = vmatpush1.msra.mxu0 %v1676
    %1678 = vmatprep.subr.mxu0 0.0
    %v1679 = vand.u32 %v59, 4294901760
    %v1680 = vsub.f32 %v59, %v1679
    %v1681 = vand.u32 %v1680, 4294901760
    %1682 = vmatpush1.msra.mxu0 %v1681
    %1683 = vmatprep.subr.mxu0 0.0
    %1684 = vmatpush1.msra.mxu0 0.0
    %1685 = vmatprep.subr.mxu0 0.0
    %1686 = vmatpush1.msra.mxu0 0.0
    %1687 = vmatprep.subr.mxu0 0.0
    %1688 = vmatpush1.msra.mxu0 0.0
    %1689 = vmatprep.subr.mxu0 0.0
    %1690 = vmatpush1.msra.mxu0 0.0
    %1691 = vmatprep.subr.mxu0 0.0
    %1692 = vmatpush1.msra.mxu0 0.0
    %1693 = vmatprep.subr.mxu0 0.0
    %1694 = vmatpush1.msra.mxu0 0.0
    %1695 = vmatprep.subr.mxu0 0.0
    %1696 = vmatpush1.msra.mxu0 0.0
    %1697 = vmatprep.subr.mxu0 0.0
    %1698 = vmatpush1.msra.mxu0 0.0
    %1699 = vmatprep.subr.mxu0 0.0
    %1700 = vmatpush1.msra.mxu0 0.0
    %1701 = vmatprep.subr.mxu0 0.0
    %1702 = vmatpush1.msra.mxu0 0.0
    %1703 = vmatprep.subr.mxu0 0.0
    %1704 = vmatpush1.msra.mxu0 0.0
    %1705 = vmatprep.subr.mxu0 0.0
    %1706 = vmatpush1.msra.mxu0 0.0
    %1707 = vmatprep.subr.mxu0 0.0
    %1708 = vmatpush1.msra.mxu0 0.0
    %1709 = vmatprep.subr.mxu0 0.0
    %1710 = vmatpush1.msra.mxu0 0.0
    %1711 = vmatprep.subr.mxu0 0.0
    %1712 = vmatpush1.msra.mxu0 0.0
    %1713 = vmatprep.subr.mxu0 0.0
    %1714 = vmatpush1.msra.mxu0 0.0
    %1715 = vmatprep.mubr.f32.mxu0 0.0
    %v1716 = vand.u32 %v1163, 4294901760
    %1717 = vmatmul.mubr.f32.gmra.mrb[0].mxu0 %v1716
    %v1718 = vpop.f32.mrb[0].mxu0
    %v1719 = vadd.f32 %v1600, %v1718
    %v1720 = vpop.f32.mrb[0].mxu0
    %1721 = vdwg.mxu0
    %1722 = vmatprep.subr.mxu0 0.0
    %v1723 = vand.u32 %v44, 4294901760
    %1724 = vmatpush1.msra.mxu0 %v1723
    %1725 = vmatprep.subr.mxu0 0.0
    %v1726 = vand.u32 %v45, 4294901760
    %1727 = vmatpush1.msra.mxu0 %v1726
    %1728 = vmatprep.subr.mxu0 0.0
    %v1729 = vand.u32 %v46, 4294901760
    %1730 = vmatpush1.msra.mxu0 %v1729
    %1731 = vmatprep.subr.mxu0 0.0
    %v1732 = vand.u32 %v47, 4294901760
    %1733 = vmatpush1.msra.mxu0 %v1732
    %1734 = vmatprep.subr.mxu0 0.0
    %v1735 = vand.u32 %v48, 4294901760
    %1736 = vmatpush1.msra.mxu0 %v1735
    %1737 = vmatprep.subr.mxu0 0.0
    %v1738 = vand.u32 %v49, 4294901760
    %1739 = vmatpush1.msra.mxu0 %v1738
    %1740 = vmatprep.subr.mxu0 0.0
    %v1741 = vand.u32 %v50, 4294901760
    %1742 = vmatpush1.msra.mxu0 %v1741
    %1743 = vmatprep.subr.mxu0 0.0
    %v1744 = vand.u32 %v51, 4294901760
    %1745 = vmatpush1.msra.mxu0 %v1744
    %1746 = vmatprep.subr.mxu0 0.0
    %v1747 = vand.u32 %v52, 4294901760
    %1748 = vmatpush1.msra.mxu0 %v1747
    %1749 = vmatprep.subr.mxu0 0.0
    %v1750 = vand.u32 %v53, 4294901760
    %1751 = vmatpush1.msra.mxu0 %v1750
    %1752 = vmatprep.subr.mxu0 0.0
    %v1753 = vand.u32 %v54, 4294901760
    %1754 = vmatpush1.msra.mxu0 %v1753
    %1755 = vmatprep.subr.mxu0 0.0
    %v1756 = vand.u32 %v55, 4294901760
    %1757 = vmatpush1.msra.mxu0 %v1756
    %1758 = vmatprep.subr.mxu0 0.0
    %v1759 = vand.u32 %v56, 4294901760
    %1760 = vmatpush1.msra.mxu0 %v1759
    %1761 = vmatprep.subr.mxu0 0.0
    %v1762 = vand.u32 %v57, 4294901760
    %1763 = vmatpush1.msra.mxu0 %v1762
    %1764 = vmatprep.subr.mxu0 0.0
    %v1765 = vand.u32 %v58, 4294901760
    %1766 = vmatpush1.msra.mxu0 %v1765
    %1767 = vmatprep.subr.mxu0 0.0
    %v1768 = vand.u32 %v59, 4294901760
    %1769 = vmatpush1.msra.mxu0 %v1768
    %1770 = vmatprep.subr.mxu0 0.0
    %1771 = vmatpush1.msra.mxu0 0.0
    %1772 = vmatprep.subr.mxu0 0.0
    %1773 = vmatpush1.msra.mxu0 0.0
    %1774 = vmatprep.subr.mxu0 0.0
    %1775 = vmatpush1.msra.mxu0 0.0
    %1776 = vmatprep.subr.mxu0 0.0
    %1777 = vmatpush1.msra.mxu0 0.0
    %1778 = vmatprep.subr.mxu0 0.0
    %1779 = vmatpush1.msra.mxu0 0.0
    %1780 = vmatprep.subr.mxu0 0.0
    %1781 = vmatpush1.msra.mxu0 0.0
    %1782 = vmatprep.subr.mxu0 0.0
    %1783 = vmatpush1.msra.mxu0 0.0
    %1784 = vmatprep.subr.mxu0 0.0
    %1785 = vmatpush1.msra.mxu0 0.0
    %1786 = vmatprep.subr.mxu0 0.0
    %1787 = vmatpush1.msra.mxu0 0.0
    %1788 = vmatprep.subr.mxu0 0.0
    %1789 = vmatpush1.msra.mxu0 0.0
    %1790 = vmatprep.subr.mxu0 0.0
    %1791 = vmatpush1.msra.mxu0 0.0
    %1792 = vmatprep.subr.mxu0 0.0
    %1793 = vmatpush1.msra.mxu0 0.0
    %1794 = vmatprep.subr.mxu0 0.0
    %1795 = vmatpush1.msra.mxu0 0.0
    %1796 = vmatprep.subr.mxu0 0.0
    %1797 = vmatpush1.msra.mxu0 0.0
    %1798 = vmatprep.subr.mxu0 0.0
    %1799 = vmatpush1.msra.mxu0 0.0
    %1800 = vmatprep.subr.mxu0 0.0
    %1801 = vmatpush1.msra.mxu0 0.0
    %1802 = vmatprep.mubr.f32.mxu0 0.0
    %v1803 = vand.u32 %v1163, 4294901760
    %1804 = vmatmul.mubr.f32.gmra.mrb[0].mxu0 %v1803
    %v1805 = vpop.f32.mrb[0].mxu0
    %v1806 = vadd.f32 %v1719, %v1805
    %v1807 = vpop.f32.mrb[0].mxu0
    %1808 = vdwg.mxu0
    %vm1809 = vcmask 39936
    %1810 = vst.msk [vmem:[#allocation5] sm:$0xff] %vm1809, %v1806
    // Predicated region
    $region14: #{mlp_forward.1} parent=1 // pred_check
      _
    $region15: #{mlp_forward.1} parent=1 // pred_check_branch
      %1812 = sbr.rel (0) target = $region17
    $region16: #{mlp_forward.1} parent=1 // pred_region
      %s1814 = ssub.s32 128, 128
      %1815 = vsyncadd [#allocation4], %s1814
      %s1817 = sshll.u32 [#allocation5], 4
      %s1818 = int_to_ptr.vmem [resolvable:$true] %s1817
      %1820 = dma.vmem_to_hbm [thread:$0]  %s1818, 128, %s2, [#allocation4]
    $region17: #{mlp_forward.1} parent=1 // pred_fallthru
      _
    // Predicated region
    $region18: #{mlp_forward.1} parent=1 // pred_check
      _
    $region19: #{mlp_forward.1} parent=1 // pred_check_branch
      %1822 = sbr.rel (0) target = $region21
    $region20: #{mlp_forward.1} parent=1 // pred_region
      %1823 = dma.done [#allocation4], 128
    $region21: #{mlp_forward.1} parent=1 // pred_fallthru
      _
    %1824 = vsyncpa [#allocation3], 1
    %1825 = vsyncpa [#allocation4], 1

</llo_original>
